<compile_context>
chip_gen: v7x
topology: tpu7x:2x2x1
jax: 0.10.0
libtpu: 0.0.40
codegen_flags: <defaults>
</compile_context>

<pallas_src>
import math
import functools

import jax
import jax.numpy as jnp
from jax.experimental import pallas as pl
from jax.experimental.pallas import tpu as pltpu


def _round_up(x, m):
    return (x + m - 1) // m * m


def _session_graph_kernel(a_in_ref, a_out_ref, h_ref,
                          w_ein_ref, b_ein_ref,
                          w_eout_ref, b_eout_ref,
                          b_iah_ref, b_oah_ref,
                          w_ih_in_ref, w_ih_out_ref, b_ih_ref,
                          w_hh_ref, b_hh_ref,
                          out_ref, *, step, hidden_pad, compute_dtype):
    Hp = hidden_pad
    TB, S, _ = h_ref.shape
    M = TB * S
    cd = compute_dtype

    # Embedded items for this batch tile, flattened to (M, Hp) for the dense matmuls.
    h = h_ref[...].astype(jnp.float32).reshape(M, Hp)

    # F.normalize(hidden, dim=-1) (PyTorch eps = 1e-12); padded lanes are 0 and stay 0.
    sumsq = jnp.sum(h * h, axis=-1, keepdims=True)
    h = h * jax.lax.rsqrt(jnp.maximum(sumsq, 1e-24))
    # TODO(synk): nn.Dropout(0.1) has no effect in eval mode; treated as identity here.

    # Adjacency halves (kept f32 -- tiny S x S matmuls, not worth extra casts).
    A_in = a_in_ref[...].astype(jnp.float32)      # (TB, S, S)
    A_out = a_out_ref[...].astype(jnp.float32)    # (TB, S, S)

    # Weights are pre-transposed / per-gate padded / (optionally) bf16 in the wrapper.
    w_ein = w_ein_ref[...]                        # (Hp, Hp)
    w_eout = w_eout_ref[...]                      # (Hp, Hp)
    w_ih_in = w_ih_in_ref[...]                    # (Hp, 3Hp)
    w_ih_out = w_ih_out_ref[...]                  # (Hp, 3Hp)
    w_hh = w_hh_ref[...]                          # (Hp, 3Hp)

    # Bias broadcasts hoisted out of the unrolled propagation loop (JAX does not CSE them).
    b_ein = jnp.broadcast_to(b_ein_ref[...].astype(jnp.float32), (M, Hp))
    b_eout = jnp.broadcast_to(b_eout_ref[...].astype(jnp.float32), (M, Hp))
    b_iah = jnp.broadcast_to(b_iah_ref[...].astype(jnp.float32), (M, Hp))
    b_oah = jnp.broadcast_to(b_oah_ref[...].astype(jnp.float32), (M, Hp))
    b_ih = jnp.broadcast_to(b_ih_ref[...].astype(jnp.float32), (M, 3 * Hp))
    b_hh = jnp.broadcast_to(b_hh_ref[...].astype(jnp.float32), (M, 3 * Hp))

    # GNN propagation steps (static unroll; step is a Python int = opt.step).
    for _ in range(step):
        h_c = h.astype(cd)

        edge_in = jnp.dot(h_c, w_ein, preferred_element_type=jnp.float32) + b_ein
        edge_out = jnp.dot(h_c, w_eout, preferred_element_type=jnp.float32) + b_eout

        input_in = jnp.einsum('bij,bjh->bih', A_in, edge_in.reshape(TB, S, Hp),
                              preferred_element_type=jnp.float32).reshape(M, Hp) + b_iah
        input_out = jnp.einsum('bij,bjh->bih', A_out, edge_out.reshape(TB, S, Hp),
                               preferred_element_type=jnp.float32).reshape(M, Hp) + b_oah

        # gi = concat([input_in, input_out], -1) @ w_ih.T + b_ih, computed without the
        # lane-dim concat by pre-splitting w_ih into its two input halves (wrapper).
        gi = (jnp.dot(input_in.astype(cd), w_ih_in, preferred_element_type=jnp.float32)
              + jnp.dot(input_out.astype(cd), w_ih_out, preferred_element_type=jnp.float32)
              + b_ih)                                                        # (M, 3Hp)
        gh = jnp.dot(h_c, w_hh, preferred_element_type=jnp.float32) + b_hh   # (M, 3Hp)

        # Gate slices fall on 128-lane boundaries because Hp is a multiple of 128.
        i_r, i_i, i_n = gi[:, :Hp], gi[:, Hp:2 * Hp], gi[:, 2 * Hp:]
        h_r, h_i, h_n = gh[:, :Hp], gh[:, Hp:2 * Hp], gh[:, 2 * Hp:]

        resetgate = jax.nn.sigmoid(i_r + h_r)
        inputgate = jax.nn.sigmoid(i_i + h_i)
        newgate = jnp.tanh(i_n + resetgate * h_n)
        h = newgate + inputgate * (h - newgate)

    out_ref[...] = h.reshape(TB, S, Hp).astype(out_ref.dtype)


def session_graph_forward(inputs, A, params, *, step=1, batch_tile=None,
                          matmul_dtype=jnp.bfloat16):
    """Equivalent of SessionGraph.forward(inputs, A) in eval mode.

    inputs: (B, S) int32 item ids, A: (B, S, 2S) float32 adjacency.
    Returns hidden: (B, S, H) float32.
    """
    emb = params["embedding"].astype(jnp.float32)   # (n_node, H)
    _, H = emb.shape
    B, S = inputs.shape

    Hp = _round_up(max(H, 1), 128)                  # lane-dense hidden dim (>= 128)
    Sp = _round_up(max(S, 1), 8)                    # sublane-aligned session length

    if batch_tile is None:
        # Aim for >= ~256 matmul rows per grid step; stays tiny in VMEM on all gens.
        batch_tile = max(1, min(B, max(1, 256 // Sp)))
    TB = batch_tile
    Bp = _round_up(B, TB)

    # ---- embedded hidden, zero-padded to (Bp, Sp, Hp) ----
    hidden0 = emb[inputs]                                            # (B, S, H) gather (glue)
    hidden0 = jnp.pad(hidden0, ((0, Bp - B), (0, Sp - S), (0, Hp - H)))

    # ---- adjacency split in the wrapper (avoids in-kernel lane slicing), zero-padded ----
    A = A.astype(jnp.float32)
    A_in = jnp.pad(A[:, :, :S], ((0, Bp - B), (0, Sp - S), (0, Sp - S)))
    A_out = jnp.pad(A[:, :, S:2 * S], ((0, Bp - B), (0, Sp - S), (0, Sp - S)))

    # ---- weights: (out,in)->(in,out), zero-pad to 128-multiples, gate blocks at
    #      128-aligned column offsets; padded rows/cols/biases are exactly 0 so padded
    #      hidden lanes provably stay 0 through every propagation step. ----
    def pad2(w, shape):
        return jnp.zeros(shape, jnp.float32).at[:w.shape[0], :w.shape[1]].set(w)

    def pad_gates_mat(w_t):        # (H, 3H) -> (Hp, 3Hp), gate g at cols [g*Hp, g*Hp+H)
        out = jnp.zeros((Hp, 3 * Hp), jnp.float32)
        for g in range(3):
            out = out.at[:H, g * Hp:g * Hp + H].set(w_t[:, g * H:(g + 1) * H])
        return out

    def pad_gates_vec(b):          # (3H,) -> (1, 3Hp)
        out = jnp.zeros((1, 3 * Hp), jnp.float32)
        for g in range(3):
            out = out.at[0, g * Hp:g * Hp + H].set(b[g * H:(g + 1) * H])
        return out

    wd = matmul_dtype
    w_ein_p = pad2(params["w_edge_in"].T.astype(jnp.float32), (Hp, Hp)).astype(wd)
    w_eout_p = pad2(params["w_edge_out"].T.astype(jnp.float32), (Hp, Hp)).astype(wd)

    w_ih_t = params["w_ih"].T.astype(jnp.float32)                    # (2H, 3H)
    w_ih_in_p = pad_gates_mat(w_ih_t[:H, :]).astype(wd)              # (Hp, 3Hp)
    w_ih_out_p = pad_gates_mat(w_ih_t[H:, :]).astype(wd)             # (Hp, 3Hp)
    w_hh_p = pad_gates_mat(params["w_hh"].T.astype(jnp.float32)).astype(wd)

    b_ein_p = pad2(params["b_edge_in"].reshape(1, H).astype(jnp.float32), (1, Hp))
    b_eout_p = pad2(params["b_edge_out"].reshape(1, H).astype(jnp.float32), (1, Hp))
    b_iah_p = pad2(params["b_iah"].reshape(1, H).astype(jnp.float32), (1, Hp))
    b_oah_p = pad2(params["b_oah"].reshape(1, H).astype(jnp.float32), (1, Hp))
    b_ih_p = pad_gates_vec(params["b_ih"].astype(jnp.float32))
    b_hh_p = pad_gates_vec(params["b_hh"].astype(jnp.float32))

    def full(shape):
        return pl.BlockSpec(shape, lambda b: (0,) * len(shape))

    kernel = functools.partial(_session_graph_kernel, step=step, hidden_pad=Hp,
                               compute_dtype=matmul_dtype)

    operands = (A_in, A_out, hidden0,
                w_ein_p, b_ein_p, w_eout_p, b_eout_p,
                b_iah_p, b_oah_p,
                w_ih_in_p, w_ih_out_p, b_ih_p,
                w_hh_p, b_hh_p)

    # Advisory cost estimate so XLA schedules surrounding ops around the custom call.
    matmul_flops = (2 * 2 * Sp * Hp * Hp          # edge_in / edge_out
                    + 2 * 2 * Sp * Sp * Hp        # adjacency matmuls
                    + 3 * 2 * Sp * Hp * 3 * Hp)   # gi (x2) + gh
    cost = pl.CostEstimate(
        flops=int(step * Bp * matmul_flops),
        transcendentals=int(step * Bp * Sp * 3 * Hp),
        bytes_accessed=int(sum(int(x.size) * jnp.dtype(x.dtype).itemsize for x in operands)
                           + Bp * Sp * Hp * 4),
    )

    out = pl.pallas_call(
        kernel,
        out_shape=jax.ShapeDtypeStruct((Bp, Sp, Hp), jnp.float32),
        grid_spec=pltpu.PrefetchScalarGridSpec(
            num_scalar_prefetch=0,
            grid=(Bp // TB,),
            in_specs=[
                pl.BlockSpec((TB, Sp, Sp), lambda b: (b, 0, 0)),    # A_in
                pl.BlockSpec((TB, Sp, Sp), lambda b: (b, 0, 0)),    # A_out
                pl.BlockSpec((TB, Sp, Hp), lambda b: (b, 0, 0)),    # embedded hidden
                full((Hp, Hp)), full((1, Hp)),                      # linear_edge_in
                full((Hp, Hp)), full((1, Hp)),                      # linear_edge_out
                full((1, Hp)), full((1, Hp)),                       # b_iah, b_oah
                full((Hp, 3 * Hp)), full((Hp, 3 * Hp)), full((1, 3 * Hp)),  # w_ih halves, b_ih
                full((Hp, 3 * Hp)), full((1, 3 * Hp)),              # w_hh, b_hh
            ],
            out_specs=pl.BlockSpec((TB, Sp, Hp), lambda b: (b, 0, 0)),
        ),
        compiler_params=pltpu.CompilerParams(dimension_semantics=("parallel",)),
        cost_estimate=cost,
    )(*operands)

    return out[:B, :S, :H]


def _session_graph_ref(inputs, A, params, *, step=1):
    """Pure-JAX reference matching SessionGraph.forward (eval mode) in float32."""
    emb = params["embedding"]
    H = emb.shape[1]
    h = emb[inputs]
    h = h / jnp.maximum(jnp.linalg.norm(h, axis=-1, keepdims=True), 1e-12)
    S = A.shape[1]
    A_in, A_out = A[:, :, :S], A[:, :, S:2 * S]
    for _ in range(step):
        edge_in = h @ params["w_edge_in"].T + params["b_edge_in"]
        edge_out = h @ params["w_edge_out"].T + params["b_edge_out"]
        input_in = jnp.einsum('bij,bjh->bih', A_in, edge_in) + params["b_iah"]
        input_out = jnp.einsum('bij,bjh->bih', A_out, edge_out) + params["b_oah"]
        cat = jnp.concatenate([input_in, input_out], axis=-1)
        gi = cat @ params["w_ih"].T + params["b_ih"]
        gh = h @ params["w_hh"].T + params["b_hh"]
        i_r, i_i, i_n = gi[..., :H], gi[..., H:2 * H], gi[..., 2 * H:]
        h_r, h_i, h_n = gh[..., :H], gh[..., H:2 * H], gh[..., 2 * H:]
        r = jax.nn.sigmoid(i_r + h_r)
        z = jax.nn.sigmoid(i_i + h_i)
        n = jnp.tanh(i_n + r * h_n)
        h = n + z * (h - n)
    return h


def init_params(key, n_node, hidden_size):
    """Deterministic init matching SessionGraph.reset_parameters():
    every parameter ~ U(-stdv, stdv), stdv = 1/sqrt(hidden_size)."""
    H = hidden_size
    stdv = 1.0 / math.sqrt(H)
    keys = jax.random.split(key, 12)

    def u(k, shape):
        return jax.random.uniform(k, shape, jnp.float32, -stdv, stdv)

    return {
        "embedding": u(keys[0], (n_node, H)),
        "w_ih": u(keys[1], (3 * H, 2 * H)),
        "w_hh": u(keys[2], (3 * H, H)),
        "b_ih": u(keys[3], (3 * H,)),
        "b_hh": u(keys[4], (3 * H,)),
        "b_iah": u(keys[5], (H,)),
        "b_oah": u(keys[6], (H,)),
        "w_edge_in": u(keys[7], (H, H)),
        "b_edge_in": u(keys[8], (H,)),
        "w_edge_out": u(keys[9], (H, H)),
        "b_edge_out": u(keys[10], (H,)),
    }


if __name__ == "__main__":
    B, S, H = 2, 8, 32          # batch, session length, hiddenSize
    n_node = 50
    step = 1                    # opt.step

    root = jax.random.PRNGKey(0)
    k_params, k_inp, k_adj = jax.random.split(root, 3)

    params = init_params(k_params, n_node, H)
    inputs = jax.random.randint(k_inp, (B, S), 0, n_node, dtype=jnp.int32)
    A = jax.random.uniform(k_adj, (B, S, 2 * S), jnp.float32)   # session-graph adjacency

    hidden = session_graph_forward(inputs, A, params, step=step)
    jax.block_until_ready(hidden)
    assert hidden.shape == (B, S, H)

    ref = _session_graph_ref(inputs, A, params, step=step)
    max_err = float(jnp.max(jnp.abs(hidden - ref)))
    assert max_err < 5e-2, f"mismatch vs pure-JAX reference: {max_err}"

    print("KERNEL_OK")
</pallas_src>

<mosaic_0001>
module attributes {stable_mosaic.version = 11 : i64} {
  func.func @_session_graph_kernel(%arg0: i32, %arg1: memref<2x8x8xf32, #tpu.memory_space<vmem>>, %arg2: memref<2x8x8xf32, #tpu.memory_space<vmem>>, %arg3: memref<2x8x128xf32, #tpu.memory_space<vmem>>, %arg4: memref<128x128xbf16, #tpu.memory_space<vmem>>, %arg5: memref<1x128xf32, #tpu.memory_space<vmem>>, %arg6: memref<128x128xbf16, #tpu.memory_space<vmem>>, %arg7: memref<1x128xf32, #tpu.memory_space<vmem>>, %arg8: memref<1x128xf32, #tpu.memory_space<vmem>>, %arg9: memref<1x128xf32, #tpu.memory_space<vmem>>, %arg10: memref<128x384xbf16, #tpu.memory_space<vmem>>, %arg11: memref<128x384xbf16, #tpu.memory_space<vmem>>, %arg12: memref<1x384xf32, #tpu.memory_space<vmem>>, %arg13: memref<128x384xbf16, #tpu.memory_space<vmem>>, %arg14: memref<1x384xf32, #tpu.memory_space<vmem>>, %arg15: memref<2x8x128xf32, #tpu.memory_space<vmem>>) attributes {dimension_semantics = [#tpu.dimension_semantics<parallel>], iteration_bounds = array<i64: 1>, scalar_prefetch = 0 : i64, scratch_operands = 0 : i64, tpu.core_type = #tpu.core_type<tc>, window_params = [{transform_indices = @transform_0, window_bounds = array<i64: 2, 8, 8>}, {transform_indices = @transform_1, window_bounds = array<i64: 2, 8, 8>}, {transform_indices = @transform_2, window_bounds = array<i64: 2, 8, 128>}, {pipeline_mode = #tpu.pipeline_mode<synchronous>, transform_indices = @transform_3, window_bounds = array<i64: 128, 128>}, {pipeline_mode = #tpu.pipeline_mode<synchronous>, transform_indices = @transform_4, window_bounds = array<i64: 1, 128>}, {pipeline_mode = #tpu.pipeline_mode<synchronous>, transform_indices = @transform_5, window_bounds = array<i64: 128, 128>}, {pipeline_mode = #tpu.pipeline_mode<synchronous>, transform_indices = @transform_6, window_bounds = array<i64: 1, 128>}, {pipeline_mode = #tpu.pipeline_mode<synchronous>, transform_indices = @transform_7, window_bounds = array<i64: 1, 128>}, {pipeline_mode = #tpu.pipeline_mode<synchronous>, transform_indices = @transform_8, window_bounds = array<i64: 1, 128>}, {pipeline_mode = #tpu.pipeline_mode<synchronous>, transform_indices = @transform_9, window_bounds = array<i64: 128, 384>}, {pipeline_mode = #tpu.pipeline_mode<synchronous>, transform_indices = @transform_10, window_bounds = array<i64: 128, 384>}, {pipeline_mode = #tpu.pipeline_mode<synchronous>, transform_indices = @transform_11, window_bounds = array<i64: 1, 384>}, {pipeline_mode = #tpu.pipeline_mode<synchronous>, transform_indices = @transform_12, window_bounds = array<i64: 128, 384>}, {pipeline_mode = #tpu.pipeline_mode<synchronous>, transform_indices = @transform_13, window_bounds = array<i64: 1, 384>}, {transform_indices = @transform_14, window_bounds = array<i64: 2, 8, 128>}]} {
    %c0 = arith.constant 0 : index
    %c0_0 = arith.constant 0 : index
    %c0_1 = arith.constant 0 : index
    %0 = vector.load %arg3[%c0, %c0_0, %c0_1] : memref<2x8x128xf32, #tpu.memory_space<vmem>>, vector<2x8x128xf32>
    %1 = vector.shape_cast %0 : vector<2x8x128xf32> to vector<16x128xf32>
    %2 = arith.mulf %1, %1 : vector<16x128xf32>
    %cst = arith.constant dense<0.000000e+00> : vector<16xf32>
    %3 = vector.multi_reduction <add>, %2, %cst [1] : vector<16x128xf32> to vector<16xf32>
    %4 = vector.shape_cast %3 : vector<16xf32> to vector<16x1xf32>
    %cst_2 = arith.constant 1.000000e-24 : f32
    %5 = vector.broadcast %cst_2 : f32 to vector<16x1xf32>
    %6 = arith.maximumf %4, %5 : vector<16x1xf32>
    %7 = math.rsqrt %6 : vector<16x1xf32>
    %8 = vector.broadcast %7 : vector<16x1xf32> to vector<16x128xf32>
    %9 = arith.mulf %1, %8 : vector<16x128xf32>
    %c0_3 = arith.constant 0 : index
    %c0_4 = arith.constant 0 : index
    %c0_5 = arith.constant 0 : index
    %10 = vector.load %arg1[%c0_3, %c0_4, %c0_5] : memref<2x8x8xf32, #tpu.memory_space<vmem>>, vector<2x8x8xf32>
    %c0_6 = arith.constant 0 : index
    %c0_7 = arith.constant 0 : index
    %c0_8 = arith.constant 0 : index
    %11 = vector.load %arg2[%c0_6, %c0_7, %c0_8] : memref<2x8x8xf32, #tpu.memory_space<vmem>>, vector<2x8x8xf32>
    %c0_9 = arith.constant 0 : index
    %c0_10 = arith.constant 0 : index
    %12 = vector.load %arg4[%c0_9, %c0_10] : memref<128x128xbf16, #tpu.memory_space<vmem>>, vector<128x128xbf16>
    %c0_11 = arith.constant 0 : index
    %c0_12 = arith.constant 0 : index
    %13 = vector.load %arg6[%c0_11, %c0_12] : memref<128x128xbf16, #tpu.memory_space<vmem>>, vector<128x128xbf16>
    %c0_13 = arith.constant 0 : index
    %c0_14 = arith.constant 0 : index
    %14 = vector.load %arg10[%c0_13, %c0_14] : memref<128x384xbf16, #tpu.memory_space<vmem>>, vector<128x384xbf16>
    %c0_15 = arith.constant 0 : index
    %c0_16 = arith.constant 0 : index
    %15 = vector.load %arg11[%c0_15, %c0_16] : memref<128x384xbf16, #tpu.memory_space<vmem>>, vector<128x384xbf16>
    %c0_17 = arith.constant 0 : index
    %c0_18 = arith.constant 0 : index
    %16 = vector.load %arg13[%c0_17, %c0_18] : memref<128x384xbf16, #tpu.memory_space<vmem>>, vector<128x384xbf16>
    %c0_19 = arith.constant 0 : index
    %c0_20 = arith.constant 0 : index
    %17 = vector.load %arg5[%c0_19, %c0_20] : memref<1x128xf32, #tpu.memory_space<vmem>>, vector<1x128xf32>
    %18 = vector.shape_cast %17 : vector<1x128xf32> to vector<1x128xf32>
    %19 = vector.broadcast %18 : vector<1x128xf32> to vector<16x128xf32>
    %c0_21 = arith.constant 0 : index
    %c0_22 = arith.constant 0 : index
    %20 = vector.load %arg7[%c0_21, %c0_22] : memref<1x128xf32, #tpu.memory_space<vmem>>, vector<1x128xf32>
    %21 = vector.shape_cast %20 : vector<1x128xf32> to vector<1x128xf32>
    %22 = vector.broadcast %21 : vector<1x128xf32> to vector<16x128xf32>
    %c0_23 = arith.constant 0 : index
    %c0_24 = arith.constant 0 : index
    %23 = vector.load %arg8[%c0_23, %c0_24] : memref<1x128xf32, #tpu.memory_space<vmem>>, vector<1x128xf32>
    %24 = vector.shape_cast %23 : vector<1x128xf32> to vector<1x128xf32>
    %25 = vector.broadcast %24 : vector<1x128xf32> to vector<16x128xf32>
    %c0_25 = arith.constant 0 : index
    %c0_26 = arith.constant 0 : index
    %26 = vector.load %arg9[%c0_25, %c0_26] : memref<1x128xf32, #tpu.memory_space<vmem>>, vector<1x128xf32>
    %27 = vector.shape_cast %26 : vector<1x128xf32> to vector<1x128xf32>
    %28 = vector.broadcast %27 : vector<1x128xf32> to vector<16x128xf32>
    %c0_27 = arith.constant 0 : index
    %c0_28 = arith.constant 0 : index
    %29 = vector.load %arg12[%c0_27, %c0_28] : memref<1x384xf32, #tpu.memory_space<vmem>>, vector<1x384xf32>
    %30 = vector.shape_cast %29 : vector<1x384xf32> to vector<1x384xf32>
    %31 = vector.broadcast %30 : vector<1x384xf32> to vector<16x384xf32>
    %c0_29 = arith.constant 0 : index
    %c0_30 = arith.constant 0 : index
    %32 = vector.load %arg14[%c0_29, %c0_30] : memref<1x384xf32, #tpu.memory_space<vmem>>, vector<1x384xf32>
    %33 = vector.shape_cast %32 : vector<1x384xf32> to vector<1x384xf32>
    %34 = vector.broadcast %33 : vector<1x384xf32> to vector<16x384xf32>
    %35 = arith.truncf %9 : vector<16x128xf32> to vector<16x128xbf16>
    %cst_31 = arith.constant dense<0.000000e+00> : vector<16x128xf32>
    %36 = tpu.matmul %35, %12, %cst_31 {dimension_numbers = #tpu.dot_dimension_numbers<[1], [0], [0], [1], [0, 0, 1, 1], [], []>} : vector<16x128xbf16>, vector<128x128xbf16>, vector<16x128xf32> -> vector<16x128xf32>
    %37 = arith.addf %36, %19 : vector<16x128xf32>
    %cst_32 = arith.constant dense<0.000000e+00> : vector<16x128xf32>
    %38 = tpu.matmul %35, %13, %cst_32 {dimension_numbers = #tpu.dot_dimension_numbers<[1], [0], [0], [1], [0, 0, 1, 1], [], []>} : vector<16x128xbf16>, vector<128x128xbf16>, vector<16x128xf32> -> vector<16x128xf32>
    %39 = arith.addf %38, %22 : vector<16x128xf32>
    %40 = vector.shape_cast %37 : vector<16x128xf32> to vector<2x8x128xf32>
    "tpu.trace_start"() <{level = 10 : i32, message = "bij,bjh->bih"}> : () -> ()
    %cst_33 = arith.constant dense<0.000000e+00> : vector<2x8x128xf32>
    %41 = tpu.matmul %10, %40, %cst_33 {dimension_numbers = #tpu.dot_dimension_numbers<[2], [1], [1], [2], [0, 0, 0, 1, 1, 2], [0], [0]>} : vector<2x8x8xf32>, vector<2x8x128xf32>, vector<2x8x128xf32> -> vector<2x8x128xf32>
    "tpu.trace_stop"() : () -> ()
    %42 = vector.shape_cast %41 : vector<2x8x128xf32> to vector<16x128xf32>
    %43 = arith.addf %42, %25 : vector<16x128xf32>
    %44 = vector.shape_cast %39 : vector<16x128xf32> to vector<2x8x128xf32>
    "tpu.trace_start"() <{level = 10 : i32, message = "bij,bjh->bih"}> : () -> ()
    %cst_34 = arith.constant dense<0.000000e+00> : vector<2x8x128xf32>
    %45 = tpu.matmul %11, %44, %cst_34 {dimension_numbers = #tpu.dot_dimension_numbers<[2], [1], [1], [2], [0, 0, 0, 1, 1, 2], [0], [0]>} : vector<2x8x8xf32>, vector<2x8x128xf32>, vector<2x8x128xf32> -> vector<2x8x128xf32>
    "tpu.trace_stop"() : () -> ()
    %46 = vector.shape_cast %45 : vector<2x8x128xf32> to vector<16x128xf32>
    %47 = arith.addf %46, %28 : vector<16x128xf32>
    %48 = arith.truncf %43 : vector<16x128xf32> to vector<16x128xbf16>
    %cst_35 = arith.constant dense<0.000000e+00> : vector<16x384xf32>
    %49 = tpu.matmul %48, %14, %cst_35 {dimension_numbers = #tpu.dot_dimension_numbers<[1], [0], [0], [1], [0, 0, 1, 1], [], []>} : vector<16x128xbf16>, vector<128x384xbf16>, vector<16x384xf32> -> vector<16x384xf32>
    %50 = arith.truncf %47 : vector<16x128xf32> to vector<16x128xbf16>
    %cst_36 = arith.constant dense<0.000000e+00> : vector<16x384xf32>
    %51 = tpu.matmul %50, %15, %cst_36 {dimension_numbers = #tpu.dot_dimension_numbers<[1], [0], [0], [1], [0, 0, 1, 1], [], []>} : vector<16x128xbf16>, vector<128x384xbf16>, vector<16x384xf32> -> vector<16x384xf32>
    %52 = arith.addf %49, %51 : vector<16x384xf32>
    %53 = arith.addf %52, %31 : vector<16x384xf32>
    %cst_37 = arith.constant dense<0.000000e+00> : vector<16x384xf32>
    %54 = tpu.matmul %35, %16, %cst_37 {dimension_numbers = #tpu.dot_dimension_numbers<[1], [0], [0], [1], [0, 0, 1, 1], [], []>} : vector<16x128xbf16>, vector<128x384xbf16>, vector<16x384xf32> -> vector<16x384xf32>
    %55 = arith.addf %54, %34 : vector<16x384xf32>
    %56 = vector.extract_strided_slice %53 {offsets = [0, 0], sizes = [16, 128], strides = [1, 1]} : vector<16x384xf32> to vector<16x128xf32>
    %57 = vector.extract_strided_slice %53 {offsets = [0, 128], sizes = [16, 128], strides = [1, 1]} : vector<16x384xf32> to vector<16x128xf32>
    %58 = vector.extract_strided_slice %53 {offsets = [0, 256], sizes = [16, 128], strides = [1, 1]} : vector<16x384xf32> to vector<16x128xf32>
    %59 = vector.extract_strided_slice %55 {offsets = [0, 0], sizes = [16, 128], strides = [1, 1]} : vector<16x384xf32> to vector<16x128xf32>
    %60 = vector.extract_strided_slice %55 {offsets = [0, 128], sizes = [16, 128], strides = [1, 1]} : vector<16x384xf32> to vector<16x128xf32>
    %61 = vector.extract_strided_slice %55 {offsets = [0, 256], sizes = [16, 128], strides = [1, 1]} : vector<16x384xf32> to vector<16x128xf32>
    %62 = arith.addf %56, %59 : vector<16x128xf32>
    %63 = arith.negf %62 : vector<16x128xf32>
    %64 = math.exp %63 : vector<16x128xf32>
    %cst_38 = arith.constant 1.000000e+00 : f32
    %65 = vector.broadcast %cst_38 : f32 to vector<16x128xf32>
    %66 = arith.addf %65, %64 : vector<16x128xf32>
    %67 = arith.divf %65, %66 : vector<16x128xf32>
    %68 = arith.addf %57, %60 : vector<16x128xf32>
    %69 = arith.negf %68 : vector<16x128xf32>
    %70 = math.exp %69 : vector<16x128xf32>
    %cst_39 = arith.constant 1.000000e+00 : f32
    %71 = vector.broadcast %cst_39 : f32 to vector<16x128xf32>
    %72 = arith.addf %71, %70 : vector<16x128xf32>
    %73 = arith.divf %71, %72 : vector<16x128xf32>
    %74 = arith.mulf %67, %61 : vector<16x128xf32>
    %75 = arith.addf %58, %74 : vector<16x128xf32>
    %76 = math.tanh %75 : vector<16x128xf32>
    %77 = arith.subf %9, %76 : vector<16x128xf32>
    %78 = arith.mulf %73, %77 : vector<16x128xf32>
    %79 = arith.addf %76, %78 : vector<16x128xf32>
    %80 = vector.shape_cast %79 : vector<16x128xf32> to vector<2x8x128xf32>
    %c0_40 = arith.constant 0 : index
    %c0_41 = arith.constant 0 : index
    %c0_42 = arith.constant 0 : index
    %81 = vector.load %arg15[%c0_40, %c0_41, %c0_42] : memref<2x8x128xf32, #tpu.memory_space<vmem>>, vector<2x8x128xf32>
    tpu.vector_store %arg15[%c0_40, %c0_41, %c0_42], %80 {strides = array<i32>} : memref<2x8x128xf32, #tpu.memory_space<vmem>>, vector<2x8x128xf32>,
    return
  }
  func.func @transform_0(%arg0: i32) -> (i32, i32, i32) {
    %c0_i32 = arith.constant 0 : i32
    %c0_i32_0 = arith.constant 0 : i32
    %c0_i32_1 = arith.constant 0 : i32
    return %arg0, %c0_i32, %c0_i32_0 : i32, i32, i32
  }
  func.func @transform_1(%arg0: i32) -> (i32, i32, i32) {
    %c0_i32 = arith.constant 0 : i32
    %c0_i32_0 = arith.constant 0 : i32
    %c0_i32_1 = arith.constant 0 : i32
    return %arg0, %c0_i32, %c0_i32_0 : i32, i32, i32
  }
  func.func @transform_2(%arg0: i32) -> (i32, i32, i32) {
    %c0_i32 = arith.constant 0 : i32
    %c0_i32_0 = arith.constant 0 : i32
    %c0_i32_1 = arith.constant 0 : i32
    return %arg0, %c0_i32, %c0_i32_0 : i32, i32, i32
  }
  func.func @transform_3(%arg0: i32) -> (i32, i32) {
    %c0_i32 = arith.constant 0 : i32
    %c0_i32_0 = arith.constant 0 : i32
    %c0_i32_1 = arith.constant 0 : i32
    return %c0_i32, %c0_i32_0 : i32, i32
  }
  func.func @transform_4(%arg0: i32) -> (i32, i32) {
    %c0_i32 = arith.constant 0 : i32
    %c0_i32_0 = arith.constant 0 : i32
    %c0_i32_1 = arith.constant 0 : i32
    return %c0_i32, %c0_i32_0 : i32, i32
  }
  func.func @transform_5(%arg0: i32) -> (i32, i32) {
    %c0_i32 = arith.constant 0 : i32
    %c0_i32_0 = arith.constant 0 : i32
    %c0_i32_1 = arith.constant 0 : i32
    return %c0_i32, %c0_i32_0 : i32, i32
  }
  func.func @transform_6(%arg0: i32) -> (i32, i32) {
    %c0_i32 = arith.constant 0 : i32
    %c0_i32_0 = arith.constant 0 : i32
    %c0_i32_1 = arith.constant 0 : i32
    return %c0_i32, %c0_i32_0 : i32, i32
  }
  func.func @transform_7(%arg0: i32) -> (i32, i32) {
    %c0_i32 = arith.constant 0 : i32
    %c0_i32_0 = arith.constant 0 : i32
    %c0_i32_1 = arith.constant 0 : i32
    return %c0_i32, %c0_i32_0 : i32, i32
  }
  func.func @transform_8(%arg0: i32) -> (i32, i32) {
    %c0_i32 = arith.constant 0 : i32
    %c0_i32_0 = arith.constant 0 : i32
    %c0_i32_1 = arith.constant 0 : i32
    return %c0_i32, %c0_i32_0 : i32, i32
  }
  func.func @transform_9(%arg0: i32) -> (i32, i32) {
    %c0_i32 = arith.constant 0 : i32
    %c0_i32_0 = arith.constant 0 : i32
    %c0_i32_1 = arith.constant 0 : i32
    return %c0_i32, %c0_i32_0 : i32, i32
  }
  func.func @transform_10(%arg0: i32) -> (i32, i32) {
    %c0_i32 = arith.constant 0 : i32
    %c0_i32_0 = arith.constant 0 : i32
    %c0_i32_1 = arith.constant 0 : i32
    return %c0_i32, %c0_i32_0 : i32, i32
  }
  func.func @transform_11(%arg0: i32) -> (i32, i32) {
    %c0_i32 = arith.constant 0 : i32
    %c0_i32_0 = arith.constant 0 : i32
    %c0_i32_1 = arith.constant 0 : i32
    return %c0_i32, %c0_i32_0 : i32, i32
  }
  func.func @transform_12(%arg0: i32) -> (i32, i32) {
    %c0_i32 = arith.constant 0 : i32
    %c0_i32_0 = arith.constant 0 : i32
    %c0_i32_1 = arith.constant 0 : i32
    return %c0_i32, %c0_i32_0 : i32, i32
  }
  func.func @transform_13(%arg0: i32) -> (i32, i32) {
    %c0_i32 = arith.constant 0 : i32
    %c0_i32_0 = arith.constant 0 : i32
    %c0_i32_1 = arith.constant 0 : i32
    return %c0_i32, %c0_i32_0 : i32, i32
  }
  func.func @transform_14(%arg0: i32) -> (i32, i32, i32) {
    %c0_i32 = arith.constant 0 : i32
    %c0_i32_0 = arith.constant 0 : i32
    %c0_i32_1 = arith.constant 0 : i32
    return %arg0, %c0_i32, %c0_i32_0 : i32, i32, i32
  }
}

</mosaic_0001>

<llo_original>
// kernel: tpu_custom_call.1
$region0: #{tpu_custom_call.1}
  #allocation0 [shape = 'u32[]', space=smem, size = 0x4, offset = 0x4, fixed_abs, tag = 'smem constant byte address 0x4 - core index']
  #allocation1 [shape = 'u32[144,128]{1,0:T(1,128)}', space=vmem, size = 0x12000, scoped, tag = 'internal scratch']
  %s0 = inlined_call_operand.hbm [shape: f32[2,8,8], index: 0, kind: input, shape index: {}]
  %s1 = inlined_call_operand.hbm [shape: f32[2,8,8], index: 1, kind: input, shape index: {}]
  %s2 = inlined_call_operand.hbm [shape: f32[2,8,128], index: 2, kind: input, shape index: {}]
  %s3 = inlined_call_operand.hbm [shape: bf16[128,128], index: 3, kind: input, shape index: {}]
  %s4 = inlined_call_operand.vmem [shape: f32[1,128], index: 4, kind: input, shape index: {}]
  %s5 = inlined_call_operand.hbm [shape: bf16[128,128], index: 5, kind: input, shape index: {}]
  %s6 = inlined_call_operand.vmem [shape: f32[1,128], index: 6, kind: input, shape index: {}]
  %s7 = inlined_call_operand.vmem [shape: f32[1,128], index: 7, kind: input, shape index: {}]
  %s8 = inlined_call_operand.vmem [shape: f32[1,128], index: 8, kind: input, shape index: {}]
  %s9 = inlined_call_operand.hbm [shape: bf16[128,384], index: 9, kind: input, shape index: {}]
  %s10 = inlined_call_operand.hbm [shape: bf16[128,384], index: 10, kind: input, shape index: {}]
  %s11 = inlined_call_operand.vmem [shape: f32[1,384], index: 11, kind: input, shape index: {}]
  %s12 = inlined_call_operand.hbm [shape: bf16[128,384], index: 12, kind: input, shape index: {}]
  %s13 = inlined_call_operand.vmem [shape: f32[1,384], index: 13, kind: input, shape index: {}]
  %s14 = inlined_call_operand.hbm [shape: f32[2,8,128], index: 14, kind: output, shape index: {}]
  %s15 = sld [smem:[#allocation0]]
  $region98: #{tpu_custom_call.1} parent=0
    _
  %s17 = ssub.s32 1, %s15
  %s18 = scalar_select 0, %s17, %s15
  $region1: #{tpu_custom_call.1} parent=0
    #allocation2 [shape = 'u8[8192]{0}', space=vmem, size = 0x2000, scoped, tag = 'input window, operand 0, single buffered']
    #allocation3 [shape = 's32[1]{0}', space=sflag, size = 0x4, scoped, tag = 'scoped memory for tpu_custom_call.1']
    #allocation4 [shape = 's32[1]{0}', space=sflag, size = 0x4, scoped, tag = 'scoped memory for tpu_custom_call.1']
    #allocation5 [shape = 'u8[8192]{0}', space=vmem, size = 0x2000, scoped, tag = 'input window, operand 1, single buffered']
    #allocation6 [shape = 's32[1]{0}', space=sflag, size = 0x4, scoped, tag = 'scoped memory for tpu_custom_call.1']
    #allocation7 [shape = 'u8[8192]{0}', space=vmem, size = 0x2000, scoped, tag = 'input window, operand 2, single buffered']
    #allocation8 [shape = 'u8[32768]{0}', space=vmem, size = 0x8000, scoped, tag = 'input window, operand 3, single buffered']
    #allocation9 [shape = 's32[1]{0}', space=sflag, size = 0x4, scoped, tag = 'scoped memory for tpu_custom_call.1']
    #allocation10 [shape = 'u8[32768]{0}', space=vmem, size = 0x8000, scoped, tag = 'input window, operand 5, single buffered']
    #allocation11 [shape = 'u8[98304]{0}', space=vmem, size = 0x18000, scoped, tag = 'input window, operand 9, single buffered']
    #allocation12 [shape = 's32[1]{0}', space=sflag, size = 0x4, scoped, tag = 'scoped memory for tpu_custom_call.1']
    #allocation13 [shape = 'u8[98304]{0}', space=vmem, size = 0x18000, scoped, tag = 'input window, operand 10, single buffered']
    #allocation14 [shape = 'u8[98304]{0}', space=vmem, size = 0x18000, scoped, tag = 'input window, operand 12, single buffered']
    #allocation15 [shape = 's32[1]{0}', space=sflag, size = 0x4, scoped, tag = 'scoped memory for tpu_custom_call.1']
    #allocation16 [shape = 'u8[8192]{0}', space=vmem, size = 0x2000, scoped, tag = 'output window, operand 0, single buffered']
    %19 = vsyncpa [#allocation3], 0
    %20 = vsyncpa [#allocation6], 0
    %21 = vsyncpa [#allocation9], 0
    %22 = vsyncpa [#allocation12], 0
    %23 = vsyncpa [#allocation15], 0
    %24 = vsyncpa [#allocation4], 0
    // Predicated region
    $region2: #{tpu_custom_call.1} parent=1 // pred_check
      _
    $region3: #{tpu_custom_call.1} parent=1 // pred_check_branch
      %26 = sbr.rel (0) target = $region5
    $region4: #{tpu_custom_call.1} parent=1 // pred_region
      %s28 = ssub.s32 256, 256
      %29 = vsyncadd [#allocation3], %s28
      %s30 = sshll.u32 [#allocation2], 4
      %s31 = int_to_ptr.vmem [resolvable:$true] %s30
      %36 = dma.hbm_to_vmem [thread:$0]  %s0, 256, %s31, [#allocation3], 128, 128, 8
    $region5: #{tpu_custom_call.1} parent=1 // pred_fallthru
      _
    // Predicated region
    $region6: #{tpu_custom_call.1} parent=1 // pred_check
      _
    $region7: #{tpu_custom_call.1} parent=1 // pred_check_branch
      %38 = sbr.rel (0) target = $region9
    $region8: #{tpu_custom_call.1} parent=1 // pred_region
      %s40 = ssub.s32 256, 256
      %41 = vsyncadd [#allocation6], %s40
      %s42 = sshll.u32 [#allocation5], 4
      %s43 = int_to_ptr.vmem [resolvable:$true] %s42
      %48 = dma.hbm_to_vmem [thread:$0]  %s1, 256, %s43, [#allocation6], 128, 128, 8
    $region9: #{tpu_custom_call.1} parent=1 // pred_fallthru
      _
    // Predicated region
    $region10: #{tpu_custom_call.1} parent=1 // pred_check
      _
    $region11: #{tpu_custom_call.1} parent=1 // pred_check_branch
      %50 = sbr.rel (0) target = $region13
    $region12: #{tpu_custom_call.1} parent=1 // pred_region
      %s52 = ssub.s32 256, 256
      %53 = vsyncadd [#allocation6], %s52
      %s54 = sshll.u32 [#allocation7], 4
      %s55 = int_to_ptr.vmem [resolvable:$true] %s54
      %60 = dma.hbm_to_vmem [thread:$0]  %s2, 256, %s55, [#allocation6], 128, 128, 8
    $region13: #{tpu_custom_call.1} parent=1 // pred_fallthru
      _
    // Predicated region
    $region14: #{tpu_custom_call.1} parent=1 // pred_check
      _
    $region15: #{tpu_custom_call.1} parent=1 // pred_check_branch
      %62 = sbr.rel (0) target = $region17
    $region16: #{tpu_custom_call.1} parent=1 // pred_region
      %s64 = ssub.s32 1024, 1024
      %65 = vsyncadd [#allocation9], %s64
      %s66 = sshll.u32 [#allocation8], 4
      %s67 = int_to_ptr.vmem [resolvable:$true] %s66
      %72 = dma.hbm_to_vmem [thread:$0]  %s3, 1024, %s67, [#allocation9], 64, 64, 4
    $region17: #{tpu_custom_call.1} parent=1 // pred_fallthru
      _
    // Predicated region
    $region18: #{tpu_custom_call.1} parent=1 // pred_check
      _
    $region19: #{tpu_custom_call.1} parent=1 // pred_check_branch
      %74 = sbr.rel (0) target = $region21
    $region20: #{tpu_custom_call.1} parent=1 // pred_region
      _
    $region21: #{tpu_custom_call.1} parent=1 // pred_fallthru
      _
    // Predicated region
    $region22: #{tpu_custom_call.1} parent=1 // pred_check
      _
    $region23: #{tpu_custom_call.1} parent=1 // pred_check_branch
      %76 = sbr.rel (0) target = $region25
    $region24: #{tpu_custom_call.1} parent=1 // pred_region
      %s78 = ssub.s32 1024, 1024
      %79 = vsyncadd [#allocation9], %s78
      %s80 = sshll.u32 [#allocation10], 4
      %s81 = int_to_ptr.vmem [resolvable:$true] %s80
      %86 = dma.hbm_to_vmem [thread:$0]  %s5, 1024, %s81, [#allocation9], 64, 64, 4
    $region25: #{tpu_custom_call.1} parent=1 // pred_fallthru
      _
    // Predicated region
    $region26: #{tpu_custom_call.1} parent=1 // pred_check
      _
    $region27: #{tpu_custom_call.1} parent=1 // pred_check_branch
      %88 = sbr.rel (0) target = $region29
    $region28: #{tpu_custom_call.1} parent=1 // pred_region
      _
    $region29: #{tpu_custom_call.1} parent=1 // pred_fallthru
      _
    // Predicated region
    $region30: #{tpu_custom_call.1} parent=1 // pred_check
      _
    $region31: #{tpu_custom_call.1} parent=1 // pred_check_branch
      %90 = sbr.rel (0) target = $region33
    $region32: #{tpu_custom_call.1} parent=1 // pred_region
      _
    $region33: #{tpu_custom_call.1} parent=1 // pred_fallthru
      _
    // Predicated region
    $region34: #{tpu_custom_call.1} parent=1 // pred_check
      _
    $region35: #{tpu_custom_call.1} parent=1 // pred_check_branch
      %92 = sbr.rel (0) target = $region37
    $region36: #{tpu_custom_call.1} parent=1 // pred_region
      _
    $region37: #{tpu_custom_call.1} parent=1 // pred_fallthru
      _
    // Predicated region
    $region38: #{tpu_custom_call.1} parent=1 // pred_check
      _
    $region39: #{tpu_custom_call.1} parent=1 // pred_check_branch
      %94 = sbr.rel (0) target = $region41
    $region40: #{tpu_custom_call.1} parent=1 // pred_region
      %s96 = ssub.s32 3072, 3072
      %97 = vsyncadd [#allocation12], %s96
      %s98 = sshll.u32 [#allocation11], 4
      %s99 = int_to_ptr.vmem [resolvable:$true] %s98
      %104 = dma.hbm_to_vmem [thread:$0]  %s9, 3072, %s99, [#allocation12], 192, 192, 12
    $region41: #{tpu_custom_call.1} parent=1 // pred_fallthru
      _
    // Predicated region
    $region42: #{tpu_custom_call.1} parent=1 // pred_check
      _
    $region43: #{tpu_custom_call.1} parent=1 // pred_check_branch
      %106 = sbr.rel (0) target = $region45
    $region44: #{tpu_custom_call.1} parent=1 // pred_region
      %s108 = ssub.s32 3072, 3072
      %109 = vsyncadd [#allocation12], %s108
      %s110 = sshll.u32 [#allocation13], 4
      %s111 = int_to_ptr.vmem [resolvable:$true] %s110
      %116 = dma.hbm_to_vmem [thread:$0]  %s10, 3072, %s111, [#allocation12], 192, 192, 12
    $region45: #{tpu_custom_call.1} parent=1 // pred_fallthru
      _
    // Predicated region
    $region46: #{tpu_custom_call.1} parent=1 // pred_check
      _
    $region47: #{tpu_custom_call.1} parent=1 // pred_check_branch
      %118 = sbr.rel (0) target = $region49
    $region48: #{tpu_custom_call.1} parent=1 // pred_region
      _
    $region49: #{tpu_custom_call.1} parent=1 // pred_fallthru
      _
    // Predicated region
    $region50: #{tpu_custom_call.1} parent=1 // pred_check
      _
    $region51: #{tpu_custom_call.1} parent=1 // pred_check_branch
      %120 = sbr.rel (0) target = $region53
    $region52: #{tpu_custom_call.1} parent=1 // pred_region
      %s122 = ssub.s32 3072, 3072
      %123 = vsyncadd [#allocation15], %s122
      %s124 = sshll.u32 [#allocation14], 4
      %s125 = int_to_ptr.vmem [resolvable:$true] %s124
      %130 = dma.hbm_to_vmem [thread:$0]  %s12, 3072, %s125, [#allocation15], 192, 192, 12
    $region53: #{tpu_custom_call.1} parent=1 // pred_fallthru
      _
    // Predicated region
    $region54: #{tpu_custom_call.1} parent=1 // pred_check
      _
    $region55: #{tpu_custom_call.1} parent=1 // pred_check_branch
      %132 = sbr.rel (0) target = $region57
    $region56: #{tpu_custom_call.1} parent=1 // pred_region
      _
    $region57: #{tpu_custom_call.1} parent=1 // pred_fallthru
      _
    // Predicated region
    $region58: #{tpu_custom_call.1} parent=1 // pred_check
      _
    $region59: #{tpu_custom_call.1} parent=1 // pred_check_branch
      %134 = sbr.rel (0) target = $region61
    $region60: #{tpu_custom_call.1} parent=1 // pred_region
      %135 = dma.done [#allocation3], 256
    $region61: #{tpu_custom_call.1} parent=1 // pred_fallthru
      _
    // Predicated region
    $region62: #{tpu_custom_call.1} parent=1 // pred_check
      _
    $region63: #{tpu_custom_call.1} parent=1 // pred_check_branch
      %137 = sbr.rel (0) target = $region65
    $region64: #{tpu_custom_call.1} parent=1 // pred_region
      %138 = dma.done [#allocation6], 256
    $region65: #{tpu_custom_call.1} parent=1 // pred_fallthru
      _
    // Predicated region
    $region66: #{tpu_custom_call.1} parent=1 // pred_check
      _
    $region67: #{tpu_custom_call.1} parent=1 // pred_check_branch
      %140 = sbr.rel (0) target = $region69
    $region68: #{tpu_custom_call.1} parent=1 // pred_region
      %141 = dma.done [#allocation6], 256
    $region69: #{tpu_custom_call.1} parent=1 // pred_fallthru
      _
    // Predicated region
    $region70: #{tpu_custom_call.1} parent=1 // pred_check
      _
    $region71: #{tpu_custom_call.1} parent=1 // pred_check_branch
      %143 = sbr.rel (0) target = $region73
    $region72: #{tpu_custom_call.1} parent=1 // pred_region
      %144 = dma.done [#allocation9], 1024
    $region73: #{tpu_custom_call.1} parent=1 // pred_fallthru
      _
    // Predicated region
    $region74: #{tpu_custom_call.1} parent=1 // pred_check
      _
    $region75: #{tpu_custom_call.1} parent=1 // pred_check_branch
      %146 = sbr.rel (0) target = $region77
    $region76: #{tpu_custom_call.1} parent=1 // pred_region
      %147 = dma.done [#allocation9], 1024
    $region77: #{tpu_custom_call.1} parent=1 // pred_fallthru
      _
    // Predicated region
    $region78: #{tpu_custom_call.1} parent=1 // pred_check
      _
    $region79: #{tpu_custom_call.1} parent=1 // pred_check_branch
      %149 = sbr.rel (0) target = $region81
    $region80: #{tpu_custom_call.1} parent=1 // pred_region
      %150 = dma.done [#allocation12], 3072
    $region81: #{tpu_custom_call.1} parent=1 // pred_fallthru
      _
    // Predicated region
    $region82: #{tpu_custom_call.1} parent=1 // pred_check
      _
    $region83: #{tpu_custom_call.1} parent=1 // pred_check_branch
      %152 = sbr.rel (0) target = $region85
    $region84: #{tpu_custom_call.1} parent=1 // pred_region
      %153 = dma.done [#allocation12], 3072
    $region85: #{tpu_custom_call.1} parent=1 // pred_fallthru
      _
    // Predicated region
    $region86: #{tpu_custom_call.1} parent=1 // pred_check
      _
    $region87: #{tpu_custom_call.1} parent=1 // pred_check_branch
      %155 = sbr.rel (0) target = $region89
    $region88: #{tpu_custom_call.1} parent=1 // pred_region
      %156 = dma.done [#allocation15], 3072
    $region89: #{tpu_custom_call.1} parent=1 // pred_fallthru
      _
    %v158 = vld [vmem:[#allocation7] sm:$0xff]
    %v159 = vld [vmem:[#allocation7 + $0x8] sm:$0xff]
    %v160 = vmul.f32 %v158, %v158
    %v161 = vmul.f32 %v159, %v159
    %162 = vadd.xlane.f32.xlu0 %v160
    %v163 = vpop.xlane.xlu0 %162
    %164 = vadd.xlane.f32.xlu0 %v161
    %v165 = vpop.xlane.xlu0 %164
    %v166 = vmax.f32 %v163, 1e-24
    %v167 = vmax.f32 %v165, 1e-24
    %v168 = vrsqrt.pop %v166
    %v169 = vrsqrt.pop %v167
    %v170 = vmul.f32 %v158, %v168
    %v171 = vmul.f32 %v159, %v169
    %v172 = vld [vmem:[#allocation2] sm:$0xff]
    %v173 = vld [vmem:[#allocation2 + $0x8] sm:$0xff]
    %v174 = vld [vmem:[#allocation5] sm:$0xff]
    %v175 = vld [vmem:[#allocation5 + $0x8] sm:$0xff]
    %v176 = vld [vmem:[#allocation8] sm:$0xf]
    %v177 = vld [vmem:[#allocation8 + $0x4] sm:$0xf]
    %v178 = vld [vmem:[#allocation8 + $0x8] sm:$0xf]
    %v179 = vld [vmem:[#allocation8 + $0xc] sm:$0xf]
    %v180 = vld [vmem:[#allocation8 + $0x10] sm:$0xf]
    %v181 = vld [vmem:[#allocation8 + $0x14] sm:$0xf]
    %v182 = vld [vmem:[#allocation8 + $0x18] sm:$0xf]
    %v183 = vld [vmem:[#allocation8 + $0x1c] sm:$0xf]
    %v184 = vld [vmem:[#allocation8 + $0x20] sm:$0xf]
    %v185 = vld [vmem:[#allocation8 + $0x24] sm:$0xf]
    %v186 = vld [vmem:[#allocation8 + $0x28] sm:$0xf]
    %v187 = vld [vmem:[#allocation8 + $0x2c] sm:$0xf]
    %v188 = vld [vmem:[#allocation8 + $0x30] sm:$0xf]
    %v189 = vld [vmem:[#allocation8 + $0x34] sm:$0xf]
    %v190 = vld [vmem:[#allocation8 + $0x38] sm:$0xf]
    %v191 = vld [vmem:[#allocation8 + $0x3c] sm:$0xf]
    %v192 = vld [vmem:[#allocation10] sm:$0xf]
    %v193 = vld [vmem:[#allocation10 + $0x4] sm:$0xf]
    %v194 = vld [vmem:[#allocation10 + $0x8] sm:$0xf]
    %v195 = vld [vmem:[#allocation10 + $0xc] sm:$0xf]
    %v196 = vld [vmem:[#allocation10 + $0x10] sm:$0xf]
    %v197 = vld [vmem:[#allocation10 + $0x14] sm:$0xf]
    %v198 = vld [vmem:[#allocation10 + $0x18] sm:$0xf]
    %v199 = vld [vmem:[#allocation10 + $0x1c] sm:$0xf]
    %v200 = vld [vmem:[#allocation10 + $0x20] sm:$0xf]
    %v201 = vld [vmem:[#allocation10 + $0x24] sm:$0xf]
    %v202 = vld [vmem:[#allocation10 + $0x28] sm:$0xf]
    %v203 = vld [vmem:[#allocation10 + $0x2c] sm:$0xf]
    %v204 = vld [vmem:[#allocation10 + $0x30] sm:$0xf]
    %v205 = vld [vmem:[#allocation10 + $0x34] sm:$0xf]
    %v206 = vld [vmem:[#allocation10 + $0x38] sm:$0xf]
    %v207 = vld [vmem:[#allocation10 + $0x3c] sm:$0xf]
    %v208 = vld [vmem:[#allocation11] sm:$0xff]
    %v209 = vld [vmem:[#allocation11 + $0x8] sm:$0xf]
    %v210 = vld [vmem:[#allocation11 + $0xc] sm:$0xff]
    %v211 = vld [vmem:[#allocation11 + $0x14] sm:$0xf]
    %v212 = vld [vmem:[#allocation11 + $0x18] sm:$0xff]
    %v213 = vld [vmem:[#allocation11 + $0x20] sm:$0xf]
    %v214 = vld [vmem:[#allocation11 + $0x24] sm:$0xff]
    %v215 = vld [vmem:[#allocation11 + $0x2c] sm:$0xf]
    %v216 = vld [vmem:[#allocation11 + $0x30] sm:$0xff]
    %v217 = vld [vmem:[#allocation11 + $0x38] sm:$0xf]
    %v218 = vld [vmem:[#allocation11 + $0x3c] sm:$0xff]
    %v219 = vld [vmem:[#allocation11 + $0x44] sm:$0xf]
    %v220 = vld [vmem:[#allocation11 + $0x48] sm:$0xff]
    %v221 = vld [vmem:[#allocation11 + $0x50] sm:$0xf]
    %v222 = vld [vmem:[#allocation11 + $0x54] sm:$0xff]
    %v223 = vld [vmem:[#allocation11 + $0x5c] sm:$0xf]
    %v224 = vld [vmem:[#allocation11 + $0x60] sm:$0xff]
    %v225 = vld [vmem:[#allocation11 + $0x68] sm:$0xf]
    %v226 = vld [vmem:[#allocation11 + $0x6c] sm:$0xff]
    %v227 = vld [vmem:[#allocation11 + $0x74] sm:$0xf]
    %v228 = vld [vmem:[#allocation11 + $0x78] sm:$0xff]
    %v229 = vld [vmem:[#allocation11 + $0x80] sm:$0xf]
    %v230 = vld [vmem:[#allocation11 + $0x84] sm:$0xff]
    %v231 = vld [vmem:[#allocation11 + $0x8c] sm:$0xf]
    %v232 = vld [vmem:[#allocation11 + $0x90] sm:$0xff]
    %v233 = vld [vmem:[#allocation11 + $0x98] sm:$0xf]
    %v234 = vld [vmem:[#allocation11 + $0x9c] sm:$0xff]
    %v235 = vld [vmem:[#allocation11 + $0xa4] sm:$0xf]
    %v236 = vld [vmem:[#allocation11 + $0xa8] sm:$0xff]
    %v237 = vld [vmem:[#allocation11 + $0xb0] sm:$0xf]
    %v238 = vld [vmem:[#allocation11 + $0xb4] sm:$0xff]
    %v239 = vld [vmem:[#allocation11 + $0xbc] sm:$0xf]
    %v240 = vld [vmem:[#allocation13] sm:$0xff]
    %v241 = vld [vmem:[#allocation13 + $0x8] sm:$0xf]
    %v242 = vld [vmem:[#allocation13 + $0xc] sm:$0xff]
    %v243 = vld [vmem:[#allocation13 + $0x14] sm:$0xf]
    %v244 = vld [vmem:[#allocation13 + $0x18] sm:$0xff]
    %v245 = vld [vmem:[#allocation13 + $0x20] sm:$0xf]
    %v246 = vld [vmem:[#allocation13 + $0x24] sm:$0xff]
    %v247 = vld [vmem:[#allocation13 + $0x2c] sm:$0xf]
    %v248 = vld [vmem:[#allocation13 + $0x30] sm:$0xff]
    %v249 = vld [vmem:[#allocation13 + $0x38] sm:$0xf]
    %v250 = vld [vmem:[#allocation13 + $0x3c] sm:$0xff]
    %v251 = vld [vmem:[#allocation13 + $0x44] sm:$0xf]
    %v252 = vld [vmem:[#allocation13 + $0x48] sm:$0xff]
    %v253 = vld [vmem:[#allocation13 + $0x50] sm:$0xf]
    %v254 = vld [vmem:[#allocation13 + $0x54] sm:$0xff]
    %v255 = vld [vmem:[#allocation13 + $0x5c] sm:$0xf]
    %v256 = vld [vmem:[#allocation13 + $0x60] sm:$0xff]
    %v257 = vld [vmem:[#allocation13 + $0x68] sm:$0xf]
    %v258 = vld [vmem:[#allocation13 + $0x6c] sm:$0xff]
    %v259 = vld [vmem:[#allocation13 + $0x74] sm:$0xf]
    %v260 = vld [vmem:[#allocation13 + $0x78] sm:$0xff]
    %v261 = vld [vmem:[#allocation13 + $0x80] sm:$0xf]
    %v262 = vld [vmem:[#allocation13 + $0x84] sm:$0xff]
    %v263 = vld [vmem:[#allocation13 + $0x8c] sm:$0xf]
    %v264 = vld [vmem:[#allocation13 + $0x90] sm:$0xff]
    %v265 = vld [vmem:[#allocation13 + $0x98] sm:$0xf]
    %v266 = vld [vmem:[#allocation13 + $0x9c] sm:$0xff]
    %v267 = vld [vmem:[#allocation13 + $0xa4] sm:$0xf]
    %v268 = vld [vmem:[#allocation13 + $0xa8] sm:$0xff]
    %v269 = vld [vmem:[#allocation13 + $0xb0] sm:$0xf]
    %v270 = vld [vmem:[#allocation13 + $0xb4] sm:$0xff]
    %v271 = vld [vmem:[#allocation13 + $0xbc] sm:$0xf]
    %v272 = vld [vmem:[#allocation14] sm:$0xff]
    %v273 = vld [vmem:[#allocation14 + $0x8] sm:$0xf]
    %v274 = vld [vmem:[#allocation14 + $0xc] sm:$0xff]
    %v275 = vld [vmem:[#allocation14 + $0x14] sm:$0xf]
    %v276 = vld [vmem:[#allocation14 + $0x18] sm:$0xff]
    %v277 = vld [vmem:[#allocation14 + $0x20] sm:$0xf]
    %v278 = vld [vmem:[#allocation14 + $0x24] sm:$0xff]
    %v279 = vld [vmem:[#allocation14 + $0x2c] sm:$0xf]
    %v280 = vld [vmem:[#allocation14 + $0x30] sm:$0xff]
    %v281 = vld [vmem:[#allocation14 + $0x38] sm:$0xf]
    %v282 = vld [vmem:[#allocation14 + $0x3c] sm:$0xff]
    %v283 = vld [vmem:[#allocation14 + $0x44] sm:$0xf]
    %v284 = vld [vmem:[#allocation14 + $0x48] sm:$0xff]
    %v285 = vld [vmem:[#allocation14 + $0x50] sm:$0xf]
    %v286 = vld [vmem:[#allocation14 + $0x54] sm:$0xff]
    %v287 = vld [vmem:[#allocation14 + $0x5c] sm:$0xf]
    %v288 = vld [vmem:[#allocation14 + $0x60] sm:$0xff]
    %v289 = vld [vmem:[#allocation14 + $0x68] sm:$0xf]
    %v290 = vld [vmem:[#allocation14 + $0x6c] sm:$0xff]
    %v291 = vld [vmem:[#allocation14 + $0x74] sm:$0xf]
    %v292 = vld [vmem:[#allocation14 + $0x78] sm:$0xff]
    %v293 = vld [vmem:[#allocation14 + $0x80] sm:$0xf]
    %v294 = vld [vmem:[#allocation14 + $0x84] sm:$0xff]
    %v295 = vld [vmem:[#allocation14 + $0x8c] sm:$0xf]
    %v296 = vld [vmem:[#allocation14 + $0x90] sm:$0xff]
    %v297 = vld [vmem:[#allocation14 + $0x98] sm:$0xf]
    %v298 = vld [vmem:[#allocation14 + $0x9c] sm:$0xff]
    %v299 = vld [vmem:[#allocation14 + $0xa4] sm:$0xf]
    %v300 = vld [vmem:[#allocation14 + $0xa8] sm:$0xff]
    %v301 = vld [vmem:[#allocation14 + $0xb0] sm:$0xf]
    %v302 = vld [vmem:[#allocation14 + $0xb4] sm:$0xff]
    %v303 = vld [vmem:[#allocation14 + $0xbc] sm:$0xf]
    %v304 = vld [vmem:[%s4] sm:$0x1]
    %v306 = vlaneseq
    %v307 = vshrl.u32 %v306, 7
    %v308 = vsub.s32 0, %v307
    %v309 = vrot.slane %v304, %v308
    %v311 = vld [vmem:[%s6] sm:$0x1]
    %v313 = vlaneseq
    %v314 = vshrl.u32 %v313, 7
    %v315 = vsub.s32 0, %v314
    %v316 = vrot.slane %v311, %v315
    %v318 = vld [vmem:[%s7] sm:$0x1]
    %v320 = vlaneseq
    %v321 = vshrl.u32 %v320, 7
    %v322 = vsub.s32 0, %v321
    %v323 = vrot.slane %v318, %v322
    %v325 = vld [vmem:[%s8] sm:$0x1]
    %v327 = vlaneseq
    %v328 = vshrl.u32 %v327, 7
    %v329 = vsub.s32 0, %v328
    %v330 = vrot.slane %v325, %v329
    %v332 = vld [vmem:[%s11] sm:$0x7]
    %v334 = vlaneseq
    %v335 = vshrl.u32 %v334, 7
    %v336 = vsub.s32 0, %v335
    %v337 = vrot.slane %v332, %v336
    %v338 = vlaneseq
    %v339 = vshrl.u32 %v338, 7
    %v340 = vsub.s32 1, %v339
    %v341 = vrot.slane %v332, %v340
    %v342 = vlaneseq
    %v343 = vshrl.u32 %v342, 7
    %v344 = vsub.s32 2, %v343
    %v345 = vrot.slane %v332, %v344
    %v349 = vld [vmem:[%s13] sm:$0x7]
    %v351 = vlaneseq
    %v352 = vshrl.u32 %v351, 7
    %v353 = vsub.s32 0, %v352
    %v354 = vrot.slane %v349, %v353
    %v355 = vlaneseq
    %v356 = vshrl.u32 %v355, 7
    %v357 = vsub.s32 1, %v356
    %v358 = vrot.slane %v349, %v357
    %v359 = vlaneseq
    %v360 = vshrl.u32 %v359, 7
    %v361 = vsub.s32 2, %v360
    %v362 = vrot.slane %v349, %v361
    %v366 = vpack.c.bf16 %v171, %v170
    %v383 = vunpack.c.l.b16 %v176
    %v384 = vunpack.c.l.b16 %v177
    %v385 = vunpack.c.l.b16 %v178
    %v386 = vunpack.c.l.b16 %v179
    %v387 = vunpack.c.l.b16 %v180
    %v388 = vunpack.c.l.b16 %v181
    %v389 = vunpack.c.l.b16 %v182
    %v390 = vunpack.c.l.b16 %v183
    %v391 = vunpack.c.l.b16 %v184
    %v392 = vunpack.c.l.b16 %v185
    %v393 = vunpack.c.l.b16 %v186
    %v394 = vunpack.c.l.b16 %v187
    %v395 = vunpack.c.l.b16 %v188
    %v396 = vunpack.c.l.b16 %v189
    %v397 = vunpack.c.l.b16 %v190
    %v398 = vunpack.c.l.b16 %v191
    %v399 = vpack.c.b16 %v384, %v383
    %v400 = vpack.c.b16 %v386, %v385
    %v401 = vpack.c.b16 %v388, %v387
    %v402 = vpack.c.b16 %v390, %v389
    %v403 = vpack.c.b16 %v392, %v391
    %v404 = vpack.c.b16 %v394, %v393
    %v405 = vpack.c.b16 %v396, %v395
    %v406 = vpack.c.b16 %v398, %v397
    %415 = vmatprep.subr.bf16.mxu0 0
    %416 = vmatpush1.bf16.msra.mxu0 %v399
    %417 = vmatprep.subr.bf16.mxu0 0
    %418 = vmatpush1.bf16.msra.mxu0 %v400
    %419 = vmatprep.subr.bf16.mxu0 0
    %420 = vmatpush1.bf16.msra.mxu0 %v401
    %421 = vmatprep.subr.bf16.mxu0 0
    %422 = vmatpush1.bf16.msra.mxu0 %v402
    %423 = vmatprep.subr.bf16.mxu0 0
    %424 = vmatpush1.bf16.msra.mxu0 %v403
    %425 = vmatprep.subr.bf16.mxu0 0
    %426 = vmatpush1.bf16.msra.mxu0 %v404
    %427 = vmatprep.subr.bf16.mxu0 0
    %428 = vmatpush1.bf16.msra.mxu0 %v405
    %429 = vmatprep.subr.bf16.mxu0 0
    %430 = vmatpush1.bf16.msra.mxu0 %v406
    %431 = vmatprep.subr.bf16.mxu0 0
    %432 = vmatpush1.bf16.msra.mxu0 0
    %433 = vmatprep.subr.bf16.mxu0 0
    %434 = vmatpush1.bf16.msra.mxu0 0
    %435 = vmatprep.subr.bf16.mxu0 0
    %436 = vmatpush1.bf16.msra.mxu0 0
    %437 = vmatprep.subr.bf16.mxu0 0
    %438 = vmatpush1.bf16.msra.mxu0 0
    %439 = vmatprep.subr.bf16.mxu0 0
    %440 = vmatpush1.bf16.msra.mxu0 0
    %441 = vmatprep.subr.bf16.mxu0 0
    %442 = vmatpush1.bf16.msra.mxu0 0
    %443 = vmatprep.subr.bf16.mxu0 0
    %444 = vmatpush1.bf16.msra.mxu0 0
    %445 = vmatprep.subr.bf16.mxu0 0
    %446 = vmatpush1.bf16.msra.mxu0 0
    %447 = vmatprep.mubr.bf16.mxu0 0
    %448 = vmatmul.mubr.bf16.gmra.mrb[0].mxu0 %v366
    %v449 = vpop.f32.mrb[0].mxu0
    %v450 = vadd.f32 %v309, %v449
    %v451 = vpop.f32.mrb[0].mxu0
    %v452 = vpop.f32.mrb[0].mxu0
    %v453 = vadd.f32 %v309, %v452
    %v454 = vpop.f32.mrb[0].mxu0
    %455 = vdwg.mxu0
    %v472 = vunpack.c.l.b16 %v192
    %v473 = vunpack.c.l.b16 %v193
    %v474 = vunpack.c.l.b16 %v194
    %v475 = vunpack.c.l.b16 %v195
    %v476 = vunpack.c.l.b16 %v196
    %v477 = vunpack.c.l.b16 %v197
    %v478 = vunpack.c.l.b16 %v198
    %v479 = vunpack.c.l.b16 %v199
    %v480 = vunpack.c.l.b16 %v200
    %v481 = vunpack.c.l.b16 %v201
    %v482 = vunpack.c.l.b16 %v202
    %v483 = vunpack.c.l.b16 %v203
    %v484 = vunpack.c.l.b16 %v204
    %v485 = vunpack.c.l.b16 %v205
    %v486 = vunpack.c.l.b16 %v206
    %v487 = vunpack.c.l.b16 %v207
    %v488 = vpack.c.b16 %v473, %v472
    %v489 = vpack.c.b16 %v475, %v474
    %v490 = vpack.c.b16 %v477, %v476
    %v491 = vpack.c.b16 %v479, %v478
    %v492 = vpack.c.b16 %v481, %v480
    %v493 = vpack.c.b16 %v483, %v482
    %v494 = vpack.c.b16 %v485, %v484
    %v495 = vpack.c.b16 %v487, %v486
    %504 = vmatprep.subr.bf16.mxu0 0
    %505 = vmatpush1.bf16.msra.mxu0 %v488
    %506 = vmatprep.subr.bf16.mxu0 0
    %507 = vmatpush1.bf16.msra.mxu0 %v489
    %508 = vmatprep.subr.bf16.mxu0 0
    %509 = vmatpush1.bf16.msra.mxu0 %v490
    %510 = vmatprep.subr.bf16.mxu0 0
    %511 = vmatpush1.bf16.msra.mxu0 %v491
    %512 = vmatprep.subr.bf16.mxu0 0
    %513 = vmatpush1.bf16.msra.mxu0 %v492
    %514 = vmatprep.subr.bf16.mxu0 0
    %515 = vmatpush1.bf16.msra.mxu0 %v493
    %516 = vmatprep.subr.bf16.mxu0 0
    %517 = vmatpush1.bf16.msra.mxu0 %v494
    %518 = vmatprep.subr.bf16.mxu0 0
    %519 = vmatpush1.bf16.msra.mxu0 %v495
    %520 = vmatprep.subr.bf16.mxu0 0
    %521 = vmatpush1.bf16.msra.mxu0 0
    %522 = vmatprep.subr.bf16.mxu0 0
    %523 = vmatpush1.bf16.msra.mxu0 0
    %524 = vmatprep.subr.bf16.mxu0 0
    %525 = vmatpush1.bf16.msra.mxu0 0
    %526 = vmatprep.subr.bf16.mxu0 0
    %527 = vmatpush1.bf16.msra.mxu0 0
    %528 = vmatprep.subr.bf16.mxu0 0
    %529 = vmatpush1.bf16.msra.mxu0 0
    %530 = vmatprep.subr.bf16.mxu0 0
    %531 = vmatpush1.bf16.msra.mxu0 0
    %532 = vmatprep.subr.bf16.mxu0 0
    %533 = vmatpush1.bf16.msra.mxu0 0
    %534 = vmatprep.subr.bf16.mxu0 0
    %535 = vmatpush1.bf16.msra.mxu0 0
    %536 = vmatprep.mubr.bf16.mxu0 0
    %537 = vmatmul.mubr.bf16.gmra.mrb[0].mxu0 %v366
    %v538 = vpop.f32.mrb[0].mxu0
    %v539 = vadd.f32 %v316, %v538
    %v540 = vpop.f32.mrb[0].mxu0
    %v541 = vpop.f32.mrb[0].mxu0
    %v542 = vadd.f32 %v316, %v541
    %v543 = vpop.f32.mrb[0].mxu0
    %544 = vdwg.mxu0
    %vm545 = vcmask 64512
    %v547 = vsel %vm545, %v172, 0
    %549 = vmatprep.subr.mxu0 0.0
    %550 = vmatpush1.msra.mxu0 %v450
    %551 = vmatprep.subr.mxu0 0.0
    %552 = vmatpush1.msra.mxu0 0.0
    %553 = vmatprep.subr.mxu0 0.0
    %554 = vmatpush1.msra.mxu0 0.0
    %555 = vmatprep.subr.mxu0 0.0
    %556 = vmatpush1.msra.mxu0 0.0
    %557 = vmatprep.subr.mxu0 0.0
    %558 = vmatpush1.msra.mxu0 0.0
    %559 = vmatprep.subr.mxu0 0.0
    %560 = vmatpush1.msra.mxu0 0.0
    %561 = vmatprep.subr.mxu0 0.0
    %562 = vmatpush1.msra.mxu0 0.0
    %563 = vmatprep.subr.mxu0 0.0
    %564 = vmatpush1.msra.mxu0 0.0
    %565 = vmatprep.subr.mxu0 0.0
    %566 = vmatpush1.msra.mxu0 0.0
    %567 = vmatprep.subr.mxu0 0.0
    %568 = vmatpush1.msra.mxu0 0.0
    %569 = vmatprep.subr.mxu0 0.0
    %570 = vmatpush1.msra.mxu0 0.0
    %571 = vmatprep.subr.mxu0 0.0
    %572 = vmatpush1.msra.mxu0 0.0
    %573 = vmatprep.subr.mxu0 0.0
    %574 = vmatpush1.msra.mxu0 0.0
    %575 = vmatprep.subr.mxu0 0.0
    %576 = vmatpush1.msra.mxu0 0.0
    %577 = vmatprep.subr.mxu0 0.0
    %578 = vmatpush1.msra.mxu0 0.0
    %579 = vmatprep.subr.mxu0 0.0
    %580 = vmatpush1.msra.mxu0 0.0
    %581 = vmatprep.subr.mxu0 0.0
    %582 = vmatpush1.msra.mxu0 0.0
    %583 = vmatprep.subr.mxu0 0.0
    %584 = vmatpush1.msra.mxu0 0.0
    %585 = vmatprep.subr.mxu0 0.0
    %586 = vmatpush1.msra.mxu0 0.0
    %587 = vmatprep.subr.mxu0 0.0
    %588 = vmatpush1.msra.mxu0 0.0
    %589 = vmatprep.subr.mxu0 0.0
    %590 = vmatpush1.msra.mxu0 0.0
    %591 = vmatprep.subr.mxu0 0.0
    %592 = vmatpush1.msra.mxu0 0.0
    %593 = vmatprep.subr.mxu0 0.0
    %594 = vmatpush1.msra.mxu0 0.0
    %595 = vmatprep.subr.mxu0 0.0
    %596 = vmatpush1.msra.mxu0 0.0
    %597 = vmatprep.subr.mxu0 0.0
    %598 = vmatpush1.msra.mxu0 0.0
    %599 = vmatprep.subr.mxu0 0.0
    %600 = vmatpush1.msra.mxu0 0.0
    %601 = vmatprep.subr.mxu0 0.0
    %602 = vmatpush1.msra.mxu0 0.0
    %603 = vmatprep.subr.mxu0 0.0
    %604 = vmatpush1.msra.mxu0 0.0
    %605 = vmatprep.subr.mxu0 0.0
    %606 = vmatpush1.msra.mxu0 0.0
    %607 = vmatprep.subr.mxu0 0.0
    %608 = vmatpush1.msra.mxu0 0.0
    %609 = vmatprep.subr.mxu0 0.0
    %610 = vmatpush1.msra.mxu0 0.0
    %611 = vmatprep.subr.mxu0 0.0
    %612 = vmatpush1.msra.mxu0 0.0
    %613 = vmatprep.mubr.f32.mxu0 0.0
    %614 = vmatmul.mubr.f32.gmra.mrb[0].mxu0 %v547
    %v615 = vpop.f32.mrb[0].mxu0
    %v616 = vadd.f32 0.0, %v615
    %v617 = vpop.f32.mrb[0].mxu0
    %618 = vdwg.mxu0
    %v620 = vsel %vm545, %v173, 0
    %622 = vmatprep.subr.mxu0 0.0
    %623 = vmatpush1.msra.mxu0 %v453
    %624 = vmatprep.subr.mxu0 0.0
    %625 = vmatpush1.msra.mxu0 0.0
    %626 = vmatprep.subr.mxu0 0.0
    %627 = vmatpush1.msra.mxu0 0.0
    %628 = vmatprep.subr.mxu0 0.0
    %629 = vmatpush1.msra.mxu0 0.0
    %630 = vmatprep.subr.mxu0 0.0
    %631 = vmatpush1.msra.mxu0 0.0
    %632 = vmatprep.subr.mxu0 0.0
    %633 = vmatpush1.msra.mxu0 0.0
    %634 = vmatprep.subr.mxu0 0.0
    %635 = vmatpush1.msra.mxu0 0.0
    %636 = vmatprep.subr.mxu0 0.0
    %637 = vmatpush1.msra.mxu0 0.0
    %638 = vmatprep.subr.mxu0 0.0
    %639 = vmatpush1.msra.mxu0 0.0
    %640 = vmatprep.subr.mxu0 0.0
    %641 = vmatpush1.msra.mxu0 0.0
    %642 = vmatprep.subr.mxu0 0.0
    %643 = vmatpush1.msra.mxu0 0.0
    %644 = vmatprep.subr.mxu0 0.0
    %645 = vmatpush1.msra.mxu0 0.0
    %646 = vmatprep.subr.mxu0 0.0
    %647 = vmatpush1.msra.mxu0 0.0
    %648 = vmatprep.subr.mxu0 0.0
    %649 = vmatpush1.msra.mxu0 0.0
    %650 = vmatprep.subr.mxu0 0.0
    %651 = vmatpush1.msra.mxu0 0.0
    %652 = vmatprep.subr.mxu0 0.0
    %653 = vmatpush1.msra.mxu0 0.0
    %654 = vmatprep.subr.mxu0 0.0
    %655 = vmatpush1.msra.mxu0 0.0
    %656 = vmatprep.subr.mxu0 0.0
    %657 = vmatpush1.msra.mxu0 0.0
    %658 = vmatprep.subr.mxu0 0.0
    %659 = vmatpush1.msra.mxu0 0.0
    %660 = vmatprep.subr.mxu0 0.0
    %661 = vmatpush1.msra.mxu0 0.0
    %662 = vmatprep.subr.mxu0 0.0
    %663 = vmatpush1.msra.mxu0 0.0
    %664 = vmatprep.subr.mxu0 0.0
    %665 = vmatpush1.msra.mxu0 0.0
    %666 = vmatprep.subr.mxu0 0.0
    %667 = vmatpush1.msra.mxu0 0.0
    %668 = vmatprep.subr.mxu0 0.0
    %669 = vmatpush1.msra.mxu0 0.0
    %670 = vmatprep.subr.mxu0 0.0
    %671 = vmatpush1.msra.mxu0 0.0
    %672 = vmatprep.subr.mxu0 0.0
    %673 = vmatpush1.msra.mxu0 0.0
    %674 = vmatprep.subr.mxu0 0.0
    %675 = vmatpush1.msra.mxu0 0.0
    %676 = vmatprep.subr.mxu0 0.0
    %677 = vmatpush1.msra.mxu0 0.0
    %678 = vmatprep.subr.mxu0 0.0
    %679 = vmatpush1.msra.mxu0 0.0
    %680 = vmatprep.subr.mxu0 0.0
    %681 = vmatpush1.msra.mxu0 0.0
    %682 = vmatprep.subr.mxu0 0.0
    %683 = vmatpush1.msra.mxu0 0.0
    %684 = vmatprep.subr.mxu0 0.0
    %685 = vmatpush1.msra.mxu0 0.0
    %686 = vmatprep.mubr.f32.mxu0 0.0
    %687 = vmatmul.mubr.f32.gmra.mrb[0].mxu0 %v620
    %v688 = vpop.f32.mrb[0].mxu0
    %v689 = vadd.f32 0.0, %v688
    %v690 = vpop.f32.mrb[0].mxu0
    %691 = vdwg.mxu0
    %v692 = vadd.f32 %v616, %v323
    %v693 = vadd.f32 %v689, %v323
    %v695 = vsel %vm545, %v174, 0
    %697 = vmatprep.subr.mxu0 0.0
    %698 = vmatpush1.msra.mxu0 %v539
    %699 = vmatprep.subr.mxu0 0.0
    %700 = vmatpush1.msra.mxu0 0.0
    %701 = vmatprep.subr.mxu0 0.0
    %702 = vmatpush1.msra.mxu0 0.0
    %703 = vmatprep.subr.mxu0 0.0
    %704 = vmatpush1.msra.mxu0 0.0
    %705 = vmatprep.subr.mxu0 0.0
    %706 = vmatpush1.msra.mxu0 0.0
    %707 = vmatprep.subr.mxu0 0.0
    %708 = vmatpush1.msra.mxu0 0.0
    %709 = vmatprep.subr.mxu0 0.0
    %710 = vmatpush1.msra.mxu0 0.0
    %711 = vmatprep.subr.mxu0 0.0
    %712 = vmatpush1.msra.mxu0 0.0
    %713 = vmatprep.subr.mxu0 0.0
    %714 = vmatpush1.msra.mxu0 0.0
    %715 = vmatprep.subr.mxu0 0.0
    %716 = vmatpush1.msra.mxu0 0.0
    %717 = vmatprep.subr.mxu0 0.0
    %718 = vmatpush1.msra.mxu0 0.0
    %719 = vmatprep.subr.mxu0 0.0
    %720 = vmatpush1.msra.mxu0 0.0
    %721 = vmatprep.subr.mxu0 0.0
    %722 = vmatpush1.msra.mxu0 0.0
    %723 = vmatprep.subr.mxu0 0.0
    %724 = vmatpush1.msra.mxu0 0.0
    %725 = vmatprep.subr.mxu0 0.0
    %726 = vmatpush1.msra.mxu0 0.0
    %727 = vmatprep.subr.mxu0 0.0
    %728 = vmatpush1.msra.mxu0 0.0
    %729 = vmatprep.subr.mxu0 0.0
    %730 = vmatpush1.msra.mxu0 0.0
    %731 = vmatprep.subr.mxu0 0.0
    %732 = vmatpush1.msra.mxu0 0.0
    %733 = vmatprep.subr.mxu0 0.0
    %734 = vmatpush1.msra.mxu0 0.0
    %735 = vmatprep.subr.mxu0 0.0
    %736 = vmatpush1.msra.mxu0 0.0
    %737 = vmatprep.subr.mxu0 0.0
    %738 = vmatpush1.msra.mxu0 0.0
    %739 = vmatprep.subr.mxu0 0.0
    %740 = vmatpush1.msra.mxu0 0.0
    %741 = vmatprep.subr.mxu0 0.0
    %742 = vmatpush1.msra.mxu0 0.0
    %743 = vmatprep.subr.mxu0 0.0
    %744 = vmatpush1.msra.mxu0 0.0
    %745 = vmatprep.subr.mxu0 0.0
    %746 = vmatpush1.msra.mxu0 0.0
    %747 = vmatprep.subr.mxu0 0.0
    %748 = vmatpush1.msra.mxu0 0.0
    %749 = vmatprep.subr.mxu0 0.0
    %750 = vmatpush1.msra.mxu0 0.0
    %751 = vmatprep.subr.mxu0 0.0
    %752 = vmatpush1.msra.mxu0 0.0
    %753 = vmatprep.subr.mxu0 0.0
    %754 = vmatpush1.msra.mxu0 0.0
    %755 = vmatprep.subr.mxu0 0.0
    %756 = vmatpush1.msra.mxu0 0.0
    %757 = vmatprep.subr.mxu0 0.0
    %758 = vmatpush1.msra.mxu0 0.0
    %759 = vmatprep.subr.mxu0 0.0
    %760 = vmatpush1.msra.mxu0 0.0
    %761 = vmatprep.mubr.f32.mxu0 0.0
    %762 = vmatmul.mubr.f32.gmra.mrb[0].mxu0 %v695
    %v763 = vpop.f32.mrb[0].mxu0
    %v764 = vadd.f32 0.0, %v763
    %v765 = vpop.f32.mrb[0].mxu0
    %766 = vdwg.mxu0
    %v768 = vsel %vm545, %v175, 0
    %770 = vmatprep.subr.mxu0 0.0
    %771 = vmatpush1.msra.mxu0 %v542
    %772 = vmatprep.subr.mxu0 0.0
    %773 = vmatpush1.msra.mxu0 0.0
    %774 = vmatprep.subr.mxu0 0.0
    %775 = vmatpush1.msra.mxu0 0.0
    %776 = vmatprep.subr.mxu0 0.0
    %777 = vmatpush1.msra.mxu0 0.0
    %778 = vmatprep.subr.mxu0 0.0
    %779 = vmatpush1.msra.mxu0 0.0
    %780 = vmatprep.subr.mxu0 0.0
    %781 = vmatpush1.msra.mxu0 0.0
    %782 = vmatprep.subr.mxu0 0.0
    %783 = vmatpush1.msra.mxu0 0.0
    %784 = vmatprep.subr.mxu0 0.0
    %785 = vmatpush1.msra.mxu0 0.0
    %786 = vmatprep.subr.mxu0 0.0
    %787 = vmatpush1.msra.mxu0 0.0
    %788 = vmatprep.subr.mxu0 0.0
    %789 = vmatpush1.msra.mxu0 0.0
    %790 = vmatprep.subr.mxu0 0.0
    %791 = vmatpush1.msra.mxu0 0.0
    %792 = vmatprep.subr.mxu0 0.0
    %793 = vmatpush1.msra.mxu0 0.0
    %794 = vmatprep.subr.mxu0 0.0
    %795 = vmatpush1.msra.mxu0 0.0
    %796 = vmatprep.subr.mxu0 0.0
    %797 = vmatpush1.msra.mxu0 0.0
    %798 = vmatprep.subr.mxu0 0.0
    %799 = vmatpush1.msra.mxu0 0.0
    %800 = vmatprep.subr.mxu0 0.0
    %801 = vmatpush1.msra.mxu0 0.0
    %802 = vmatprep.subr.mxu0 0.0
    %803 = vmatpush1.msra.mxu0 0.0
    %804 = vmatprep.subr.mxu0 0.0
    %805 = vmatpush1.msra.mxu0 0.0
    %806 = vmatprep.subr.mxu0 0.0
    %807 = vmatpush1.msra.mxu0 0.0
    %808 = vmatprep.subr.mxu0 0.0
    %809 = vmatpush1.msra.mxu0 0.0
    %810 = vmatprep.subr.mxu0 0.0
    %811 = vmatpush1.msra.mxu0 0.0
    %812 = vmatprep.subr.mxu0 0.0
    %813 = vmatpush1.msra.mxu0 0.0
    %814 = vmatprep.subr.mxu0 0.0
    %815 = vmatpush1.msra.mxu0 0.0
    %816 = vmatprep.subr.mxu0 0.0
    %817 = vmatpush1.msra.mxu0 0.0
    %818 = vmatprep.subr.mxu0 0.0
    %819 = vmatpush1.msra.mxu0 0.0
    %820 = vmatprep.subr.mxu0 0.0
    %821 = vmatpush1.msra.mxu0 0.0
    %822 = vmatprep.subr.mxu0 0.0
    %823 = vmatpush1.msra.mxu0 0.0
    %824 = vmatprep.subr.mxu0 0.0
    %825 = vmatpush1.msra.mxu0 0.0
    %826 = vmatprep.subr.mxu0 0.0
    %827 = vmatpush1.msra.mxu0 0.0
    %828 = vmatprep.subr.mxu0 0.0
    %829 = vmatpush1.msra.mxu0 0.0
    %830 = vmatprep.subr.mxu0 0.0
    %831 = vmatpush1.msra.mxu0 0.0
    %832 = vmatprep.subr.mxu0 0.0
    %833 = vmatpush1.msra.mxu0 0.0
    %834 = vmatprep.mubr.f32.mxu0 0.0
    %835 = vmatmul.mubr.f32.gmra.mrb[0].mxu0 %v768
    %v836 = vpop.f32.mrb[0].mxu0
    %v837 = vadd.f32 0.0, %v836
    %v838 = vpop.f32.mrb[0].mxu0
    %839 = vdwg.mxu0
    %v840 = vadd.f32 %v764, %v330
    %v841 = vadd.f32 %v837, %v330
    %v842 = vpack.c.bf16 %v693, %v692
    %v843 = vpack.c.bf16 %v841, %v840
    %v876 = vunpack.c.l.b16 %v240
    %v877 = vunpack.c.h.b16 %v240
    %v878 = vunpack.c.l.b16 %v241
    %v879 = vunpack.c.l.b16 %v242
    %v880 = vunpack.c.h.b16 %v242
    %v881 = vunpack.c.l.b16 %v243
    %v882 = vunpack.c.l.b16 %v244
    %v883 = vunpack.c.h.b16 %v244
    %v884 = vunpack.c.l.b16 %v245
    %v885 = vunpack.c.l.b16 %v246
    %v886 = vunpack.c.h.b16 %v246
    %v887 = vunpack.c.l.b16 %v247
    %v888 = vunpack.c.l.b16 %v248
    %v889 = vunpack.c.h.b16 %v248
    %v890 = vunpack.c.l.b16 %v249
    %v891 = vunpack.c.l.b16 %v250
    %v892 = vunpack.c.h.b16 %v250
    %v893 = vunpack.c.l.b16 %v251
    %v894 = vunpack.c.l.b16 %v252
    %v895 = vunpack.c.h.b16 %v252
    %v896 = vunpack.c.l.b16 %v253
    %v897 = vunpack.c.l.b16 %v254
    %v898 = vunpack.c.h.b16 %v254
    %v899 = vunpack.c.l.b16 %v255
    %v900 = vunpack.c.l.b16 %v256
    %v901 = vunpack.c.h.b16 %v256
    %v902 = vunpack.c.l.b16 %v257
    %v903 = vunpack.c.l.b16 %v258
    %v904 = vunpack.c.h.b16 %v258
    %v905 = vunpack.c.l.b16 %v259
    %v906 = vunpack.c.l.b16 %v260
    %v907 = vunpack.c.h.b16 %v260
    %v908 = vunpack.c.l.b16 %v261
    %v909 = vunpack.c.l.b16 %v262
    %v910 = vunpack.c.h.b16 %v262
    %v911 = vunpack.c.l.b16 %v263
    %v912 = vunpack.c.l.b16 %v264
    %v913 = vunpack.c.h.b16 %v264
    %v914 = vunpack.c.l.b16 %v265
    %v915 = vunpack.c.l.b16 %v266
    %v916 = vunpack.c.h.b16 %v266
    %v917 = vunpack.c.l.b16 %v267
    %v918 = vunpack.c.l.b16 %v268
    %v919 = vunpack.c.h.b16 %v268
    %v920 = vunpack.c.l.b16 %v269
    %v921 = vunpack.c.l.b16 %v270
    %v922 = vunpack.c.h.b16 %v270
    %v923 = vunpack.c.l.b16 %v271
    %v924 = vpack.c.b16 %v879, %v876
    %v925 = vpack.c.b16 %v880, %v877
    %v926 = vpack.c.b16 %v881, %v878
    %v927 = vpack.c.b16 %v885, %v882
    %v928 = vpack.c.b16 %v886, %v883
    %v929 = vpack.c.b16 %v887, %v884
    %v930 = vpack.c.b16 %v891, %v888
    %v931 = vpack.c.b16 %v892, %v889
    %v932 = vpack.c.b16 %v893, %v890
    %v933 = vpack.c.b16 %v897, %v894
    %v934 = vpack.c.b16 %v898, %v895
    %v935 = vpack.c.b16 %v899, %v896
    %v936 = vpack.c.b16 %v903, %v900
    %v937 = vpack.c.b16 %v904, %v901
    %v938 = vpack.c.b16 %v905, %v902
    %v939 = vpack.c.b16 %v909, %v906
    %v940 = vpack.c.b16 %v910, %v907
    %v941 = vpack.c.b16 %v911, %v908
    %v942 = vpack.c.b16 %v915, %v912
    %v943 = vpack.c.b16 %v916, %v913
    %v944 = vpack.c.b16 %v917, %v914
    %v945 = vpack.c.b16 %v921, %v918
    %v946 = vpack.c.b16 %v922, %v919
    %v947 = vpack.c.b16 %v923, %v920
    %972 = vmatprep.subr.bf16.mxu0 %v925
    %973 = vmatpush1.bf16.msra.mxu0 %v924
    %974 = vmatprep.subr.bf16.mxu0 %v928
    %975 = vmatpush1.bf16.msra.mxu0 %v927
    %976 = vmatprep.subr.bf16.mxu0 %v931
    %977 = vmatpush1.bf16.msra.mxu0 %v930
    %978 = vmatprep.subr.bf16.mxu0 %v934
    %979 = vmatpush1.bf16.msra.mxu0 %v933
    %980 = vmatprep.subr.bf16.mxu0 %v937
    %981 = vmatpush1.bf16.msra.mxu0 %v936
    %982 = vmatprep.subr.bf16.mxu0 %v940
    %983 = vmatpush1.bf16.msra.mxu0 %v939
    %984 = vmatprep.subr.bf16.mxu0 %v943
    %985 = vmatpush1.bf16.msra.mxu0 %v942
    %986 = vmatprep.subr.bf16.mxu0 %v946
    %987 = vmatpush1.bf16.msra.mxu0 %v945
    %988 = vmatprep.subr.bf16.mxu0 0
    %989 = vmatpush1.bf16.msra.mxu0 0
    %990 = vmatprep.subr.bf16.mxu0 0
    %991 = vmatpush1.bf16.msra.mxu0 0
    %992 = vmatprep.subr.bf16.mxu0 0
    %993 = vmatpush1.bf16.msra.mxu0 0
    %994 = vmatprep.subr.bf16.mxu0 0
    %995 = vmatpush1.bf16.msra.mxu0 0
    %996 = vmatprep.subr.bf16.mxu0 0
    %997 = vmatpush1.bf16.msra.mxu0 0
    %998 = vmatprep.subr.bf16.mxu0 0
    %999 = vmatpush1.bf16.msra.mxu0 0
    %1000 = vmatprep.subr.bf16.mxu0 0
    %1001 = vmatpush1.bf16.msra.mxu0 0
    %1002 = vmatprep.subr.bf16.mxu0 0
    %1003 = vmatpush1.bf16.msra.mxu0 0
    %1004 = vmatprep.mubr.bf16.mxu0 0
    %1005 = vmatmul.mubr.bf16.gmra.mrb[0].mxu0 %v843
    %v1006 = vpop.f32.mrb[0].mxu0
    %v1007 = vadd.f32 0.0, %v1006
    %v1008 = vpop.f32.mrb[0].mxu0
    %v1009 = vadd.f32 0.0, %v1008
    %v1010 = vpop.f32.mrb[0].mxu0
    %v1011 = vadd.f32 0.0, %v1010
    %v1012 = vpop.f32.mrb[0].mxu0
    %v1013 = vadd.f32 0.0, %v1012
    %1014 = vdwg.mxu0
    %1015 = vmatprep.subr.bf16.mxu0 0
    %1016 = vmatpush1.bf16.msra.mxu0 %v926
    %1017 = vmatprep.subr.bf16.mxu0 0
    %1018 = vmatpush1.bf16.msra.mxu0 %v929
    %1019 = vmatprep.subr.bf16.mxu0 0
    %1020 = vmatpush1.bf16.msra.mxu0 %v932
    %1021 = vmatprep.subr.bf16.mxu0 0
    %1022 = vmatpush1.bf16.msra.mxu0 %v935
    %1023 = vmatprep.subr.bf16.mxu0 0
    %1024 = vmatpush1.bf16.msra.mxu0 %v938
    %1025 = vmatprep.subr.bf16.mxu0 0
    %1026 = vmatpush1.bf16.msra.mxu0 %v941
    %1027 = vmatprep.subr.bf16.mxu0 0
    %1028 = vmatpush1.bf16.msra.mxu0 %v944
    %1029 = vmatprep.subr.bf16.mxu0 0
    %1030 = vmatpush1.bf16.msra.mxu0 %v947
    %1031 = vmatprep.subr.bf16.mxu0 0
    %1032 = vmatpush1.bf16.msra.mxu0 0
    %1033 = vmatprep.subr.bf16.mxu0 0
    %1034 = vmatpush1.bf16.msra.mxu0 0
    %1035 = vmatprep.subr.bf16.mxu0 0
    %1036 = vmatpush1.bf16.msra.mxu0 0
    %1037 = vmatprep.subr.bf16.mxu0 0
    %1038 = vmatpush1.bf16.msra.mxu0 0
    %1039 = vmatprep.subr.bf16.mxu0 0
    %1040 = vmatpush1.bf16.msra.mxu0 0
    %1041 = vmatprep.subr.bf16.mxu0 0
    %1042 = vmatpush1.bf16.msra.mxu0 0
    %1043 = vmatprep.subr.bf16.mxu0 0
    %1044 = vmatpush1.bf16.msra.mxu0 0
    %1045 = vmatprep.subr.bf16.mxu0 0
    %1046 = vmatpush1.bf16.msra.mxu0 0
    %1047 = vmatprep.mubr.bf16.mxu0 0
    %1048 = vmatmul.mubr.bf16.gmra.mrb[0].mxu0 %v843
    %v1049 = vpop.f32.mrb[0].mxu0
    %v1050 = vadd.f32 0.0, %v1049
    %v1051 = vpop.f32.mrb[0].mxu0
    %v1052 = vpop.f32.mrb[0].mxu0
    %v1053 = vadd.f32 0.0, %v1052
    %v1054 = vpop.f32.mrb[0].mxu0
    %1055 = vdwg.mxu0
    %v1088 = vunpack.c.l.b16 %v208
    %v1089 = vunpack.c.h.b16 %v208
    %v1090 = vunpack.c.l.b16 %v209
    %v1091 = vunpack.c.l.b16 %v210
    %v1092 = vunpack.c.h.b16 %v210
    %v1093 = vunpack.c.l.b16 %v211
    %v1094 = vunpack.c.l.b16 %v212
    %v1095 = vunpack.c.h.b16 %v212
    %v1096 = vunpack.c.l.b16 %v213
    %v1097 = vunpack.c.l.b16 %v214
    %v1098 = vunpack.c.h.b16 %v214
    %v1099 = vunpack.c.l.b16 %v215
    %v1100 = vunpack.c.l.b16 %v216
    %v1101 = vunpack.c.h.b16 %v216
    %v1102 = vunpack.c.l.b16 %v217
    %v1103 = vunpack.c.l.b16 %v218
    %v1104 = vunpack.c.h.b16 %v218
    %v1105 = vunpack.c.l.b16 %v219
    %v1106 = vunpack.c.l.b16 %v220
    %v1107 = vunpack.c.h.b16 %v220
    %v1108 = vunpack.c.l.b16 %v221
    %v1109 = vunpack.c.l.b16 %v222
    %v1110 = vunpack.c.h.b16 %v222
    %v1111 = vunpack.c.l.b16 %v223
    %v1112 = vunpack.c.l.b16 %v224
    %v1113 = vunpack.c.h.b16 %v224
    %v1114 = vunpack.c.l.b16 %v225
    %v1115 = vunpack.c.l.b16 %v226
    %v1116 = vunpack.c.h.b16 %v226
    %v1117 = vunpack.c.l.b16 %v227
    %v1118 = vunpack.c.l.b16 %v228
    %v1119 = vunpack.c.h.b16 %v228
    %v1120 = vunpack.c.l.b16 %v229
    %v1121 = vunpack.c.l.b16 %v230
    %v1122 = vunpack.c.h.b16 %v230
    %v1123 = vunpack.c.l.b16 %v231
    %v1124 = vunpack.c.l.b16 %v232
    %v1125 = vunpack.c.h.b16 %v232
    %v1126 = vunpack.c.l.b16 %v233
    %v1127 = vunpack.c.l.b16 %v234
    %v1128 = vunpack.c.h.b16 %v234
    %v1129 = vunpack.c.l.b16 %v235
    %v1130 = vunpack.c.l.b16 %v236
    %v1131 = vunpack.c.h.b16 %v236
    %v1132 = vunpack.c.l.b16 %v237
    %v1133 = vunpack.c.l.b16 %v238
    %v1134 = vunpack.c.h.b16 %v238
    %v1135 = vunpack.c.l.b16 %v239
    %v1136 = vpack.c.b16 %v1091, %v1088
    %v1137 = vpack.c.b16 %v1092, %v1089
    %v1138 = vpack.c.b16 %v1093, %v1090
    %v1139 = vpack.c.b16 %v1097, %v1094
    %v1140 = vpack.c.b16 %v1098, %v1095
    %v1141 = vpack.c.b16 %v1099, %v1096
    %v1142 = vpack.c.b16 %v1103, %v1100
    %v1143 = vpack.c.b16 %v1104, %v1101
    %v1144 = vpack.c.b16 %v1105, %v1102
    %v1145 = vpack.c.b16 %v1109, %v1106
    %v1146 = vpack.c.b16 %v1110, %v1107
    %v1147 = vpack.c.b16 %v1111, %v1108
    %v1148 = vpack.c.b16 %v1115, %v1112
    %v1149 = vpack.c.b16 %v1116, %v1113
    %v1150 = vpack.c.b16 %v1117, %v1114
    %v1151 = vpack.c.b16 %v1121, %v1118
    %v1152 = vpack.c.b16 %v1122, %v1119
    %v1153 = vpack.c.b16 %v1123, %v1120
    %v1154 = vpack.c.b16 %v1127, %v1124
    %v1155 = vpack.c.b16 %v1128, %v1125
    %v1156 = vpack.c.b16 %v1129, %v1126
    %v1157 = vpack.c.b16 %v1133, %v1130
    %v1158 = vpack.c.b16 %v1134, %v1131
    %v1159 = vpack.c.b16 %v1135, %v1132
    %1184 = vmatprep.subr.bf16.mxu0 %v1137
    %1185 = vmatpush1.bf16.msra.mxu0 %v1136
    %1186 = vmatprep.subr.bf16.mxu0 %v1140
    %1187 = vmatpush1.bf16.msra.mxu0 %v1139
    %1188 = vmatprep.subr.bf16.mxu0 %v1143
    %1189 = vmatpush1.bf16.msra.mxu0 %v1142
    %1190 = vmatprep.subr.bf16.mxu0 %v1146
    %1191 = vmatpush1.bf16.msra.mxu0 %v1145
    %1192 = vmatprep.subr.bf16.mxu0 %v1149
    %1193 = vmatpush1.bf16.msra.mxu0 %v1148
    %1194 = vmatprep.subr.bf16.mxu0 %v1152
    %1195 = vmatpush1.bf16.msra.mxu0 %v1151
    %1196 = vmatprep.subr.bf16.mxu0 %v1155
    %1197 = vmatpush1.bf16.msra.mxu0 %v1154
    %1198 = vmatprep.subr.bf16.mxu0 %v1158
    %1199 = vmatpush1.bf16.msra.mxu0 %v1157
    %1200 = vmatprep.subr.bf16.mxu0 0
    %1201 = vmatpush1.bf16.msra.mxu0 0
    %1202 = vmatprep.subr.bf16.mxu0 0
    %1203 = vmatpush1.bf16.msra.mxu0 0
    %1204 = vmatprep.subr.bf16.mxu0 0
    %1205 = vmatpush1.bf16.msra.mxu0 0
    %1206 = vmatprep.subr.bf16.mxu0 0
    %1207 = vmatpush1.bf16.msra.mxu0 0
    %1208 = vmatprep.subr.bf16.mxu0 0
    %1209 = vmatpush1.bf16.msra.mxu0 0
    %1210 = vmatprep.subr.bf16.mxu0 0
    %1211 = vmatpush1.bf16.msra.mxu0 0
    %1212 = vmatprep.subr.bf16.mxu0 0
    %1213 = vmatpush1.bf16.msra.mxu0 0
    %1214 = vmatprep.subr.bf16.mxu0 0
    %1215 = vmatpush1.bf16.msra.mxu0 0
    %1216 = vmatprep.mubr.bf16.mxu0 0
    %1217 = vmatmul.mubr.bf16.gmra.mrb[0].mxu0 %v842
    %v1218 = vpop.f32.mrb[0].mxu0
    %v1219 = vadd.f32 %v1007, %v1218
    %v1220 = vpop.f32.mrb[0].mxu0
    %v1221 = vadd.f32 %v1009, %v1220
    %v1222 = vpop.f32.mrb[0].mxu0
    %v1223 = vadd.f32 %v1011, %v1222
    %v1224 = vpop.f32.mrb[0].mxu0
    %v1225 = vadd.f32 %v1013, %v1224
    %1226 = vdwg.mxu0
    %1227 = vmatprep.subr.bf16.mxu0 0
    %1228 = vmatpush1.bf16.msra.mxu0 %v1138
    %1229 = vmatprep.subr.bf16.mxu0 0
    %1230 = vmatpush1.bf16.msra.mxu0 %v1141
    %1231 = vmatprep.subr.bf16.mxu0 0
    %1232 = vmatpush1.bf16.msra.mxu0 %v1144
    %1233 = vmatprep.subr.bf16.mxu0 0
    %1234 = vmatpush1.bf16.msra.mxu0 %v1147
    %1235 = vmatprep.subr.bf16.mxu0 0
    %1236 = vmatpush1.bf16.msra.mxu0 %v1150
    %1237 = vmatprep.subr.bf16.mxu0 0
    %1238 = vmatpush1.bf16.msra.mxu0 %v1153
    %1239 = vmatprep.subr.bf16.mxu0 0
    %1240 = vmatpush1.bf16.msra.mxu0 %v1156
    %1241 = vmatprep.subr.bf16.mxu0 0
    %1242 = vmatpush1.bf16.msra.mxu0 %v1159
    %1243 = vmatprep.subr.bf16.mxu0 0
    %1244 = vmatpush1.bf16.msra.mxu0 0
    %1245 = vmatprep.subr.bf16.mxu0 0
    %1246 = vmatpush1.bf16.msra.mxu0 0
    %1247 = vmatprep.subr.bf16.mxu0 0
    %1248 = vmatpush1.bf16.msra.mxu0 0
    %1249 = vmatprep.subr.bf16.mxu0 0
    %1250 = vmatpush1.bf16.msra.mxu0 0
    %1251 = vmatprep.subr.bf16.mxu0 0
    %1252 = vmatpush1.bf16.msra.mxu0 0
    %1253 = vmatprep.subr.bf16.mxu0 0
    %1254 = vmatpush1.bf16.msra.mxu0 0
    %1255 = vmatprep.subr.bf16.mxu0 0
    %1256 = vmatpush1.bf16.msra.mxu0 0
    %1257 = vmatprep.subr.bf16.mxu0 0
    %1258 = vmatpush1.bf16.msra.mxu0 0
    %1259 = vmatprep.mubr.bf16.mxu0 0
    %1260 = vmatmul.mubr.bf16.gmra.mrb[0].mxu0 %v842
    %v1261 = vpop.f32.mrb[0].mxu0
    %v1262 = vadd.f32 %v1050, %v1261
    %v1263 = vpop.f32.mrb[0].mxu0
    %v1264 = vpop.f32.mrb[0].mxu0
    %v1265 = vadd.f32 %v1053, %v1264
    %v1266 = vpop.f32.mrb[0].mxu0
    %1267 = vdwg.mxu0
    %v1268 = vadd.f32 %v1219, %v337
    %v1269 = vadd.f32 %v1221, %v341
    %v1270 = vadd.f32 %v1262, %v345
    %v1271 = vadd.f32 %v1223, %v337
    %v1272 = vadd.f32 %v1225, %v341
    %v1273 = vadd.f32 %v1265, %v345
    %v1306 = vunpack.c.l.b16 %v272
    %v1307 = vunpack.c.h.b16 %v272
    %v1308 = vunpack.c.l.b16 %v273
    %v1309 = vunpack.c.l.b16 %v274
    %v1310 = vunpack.c.h.b16 %v274
    %v1311 = vunpack.c.l.b16 %v275
    %v1312 = vunpack.c.l.b16 %v276
    %v1313 = vunpack.c.h.b16 %v276
    %v1314 = vunpack.c.l.b16 %v277
    %v1315 = vunpack.c.l.b16 %v278
    %v1316 = vunpack.c.h.b16 %v278
    %v1317 = vunpack.c.l.b16 %v279
    %v1318 = vunpack.c.l.b16 %v280
    %v1319 = vunpack.c.h.b16 %v280
    %v1320 = vunpack.c.l.b16 %v281
    %v1321 = vunpack.c.l.b16 %v282
    %v1322 = vunpack.c.h.b16 %v282
    %v1323 = vunpack.c.l.b16 %v283
    %v1324 = vunpack.c.l.b16 %v284
    %v1325 = vunpack.c.h.b16 %v284
    %v1326 = vunpack.c.l.b16 %v285
    %v1327 = vunpack.c.l.b16 %v286
    %v1328 = vunpack.c.h.b16 %v286
    %v1329 = vunpack.c.l.b16 %v287
    %v1330 = vunpack.c.l.b16 %v288
    %v1331 = vunpack.c.h.b16 %v288
    %v1332 = vunpack.c.l.b16 %v289
    %v1333 = vunpack.c.l.b16 %v290
    %v1334 = vunpack.c.h.b16 %v290
    %v1335 = vunpack.c.l.b16 %v291
    %v1336 = vunpack.c.l.b16 %v292
    %v1337 = vunpack.c.h.b16 %v292
    %v1338 = vunpack.c.l.b16 %v293
    %v1339 = vunpack.c.l.b16 %v294
    %v1340 = vunpack.c.h.b16 %v294
    %v1341 = vunpack.c.l.b16 %v295
    %v1342 = vunpack.c.l.b16 %v296
    %v1343 = vunpack.c.h.b16 %v296
    %v1344 = vunpack.c.l.b16 %v297
    %v1345 = vunpack.c.l.b16 %v298
    %v1346 = vunpack.c.h.b16 %v298
    %v1347 = vunpack.c.l.b16 %v299
    %v1348 = vunpack.c.l.b16 %v300
    %v1349 = vunpack.c.h.b16 %v300
    %v1350 = vunpack.c.l.b16 %v301
    %v1351 = vunpack.c.l.b16 %v302
    %v1352 = vunpack.c.h.b16 %v302
    %v1353 = vunpack.c.l.b16 %v303
    %v1354 = vpack.c.b16 %v1309, %v1306
    %v1355 = vpack.c.b16 %v1310, %v1307
    %v1356 = vpack.c.b16 %v1311, %v1308
    %v1357 = vpack.c.b16 %v1315, %v1312
    %v1358 = vpack.c.b16 %v1316, %v1313
    %v1359 = vpack.c.b16 %v1317, %v1314
    %v1360 = vpack.c.b16 %v1321, %v1318
    %v1361 = vpack.c.b16 %v1322, %v1319
    %v1362 = vpack.c.b16 %v1323, %v1320
    %v1363 = vpack.c.b16 %v1327, %v1324
    %v1364 = vpack.c.b16 %v1328, %v1325
    %v1365 = vpack.c.b16 %v1329, %v1326
    %v1366 = vpack.c.b16 %v1333, %v1330
    %v1367 = vpack.c.b16 %v1334, %v1331
    %v1368 = vpack.c.b16 %v1335, %v1332
    %v1369 = vpack.c.b16 %v1339, %v1336
    %v1370 = vpack.c.b16 %v1340, %v1337
    %v1371 = vpack.c.b16 %v1341, %v1338
    %v1372 = vpack.c.b16 %v1345, %v1342
    %v1373 = vpack.c.b16 %v1346, %v1343
    %v1374 = vpack.c.b16 %v1347, %v1344
    %v1375 = vpack.c.b16 %v1351, %v1348
    %v1376 = vpack.c.b16 %v1352, %v1349
    %v1377 = vpack.c.b16 %v1353, %v1350
    %1402 = vmatprep.subr.bf16.mxu0 %v1355
    %1403 = vmatpush1.bf16.msra.mxu0 %v1354
    %1404 = vmatprep.subr.bf16.mxu0 %v1358
    %1405 = vmatpush1.bf16.msra.mxu0 %v1357
    %1406 = vmatprep.subr.bf16.mxu0 %v1361
    %1407 = vmatpush1.bf16.msra.mxu0 %v1360
    %1408 = vmatprep.subr.bf16.mxu0 %v1364
    %1409 = vmatpush1.bf16.msra.mxu0 %v1363
    %1410 = vmatprep.subr.bf16.mxu0 %v1367
    %1411 = vmatpush1.bf16.msra.mxu0 %v1366
    %1412 = vmatprep.subr.bf16.mxu0 %v1370
    %1413 = vmatpush1.bf16.msra.mxu0 %v1369
    %1414 = vmatprep.subr.bf16.mxu0 %v1373
    %1415 = vmatpush1.bf16.msra.mxu0 %v1372
    %1416 = vmatprep.subr.bf16.mxu0 %v1376
    %1417 = vmatpush1.bf16.msra.mxu0 %v1375
    %1418 = vmatprep.subr.bf16.mxu0 0
    %1419 = vmatpush1.bf16.msra.mxu0 0
    %1420 = vmatprep.subr.bf16.mxu0 0
    %1421 = vmatpush1.bf16.msra.mxu0 0
    %1422 = vmatprep.subr.bf16.mxu0 0
    %1423 = vmatpush1.bf16.msra.mxu0 0
    %1424 = vmatprep.subr.bf16.mxu0 0
    %1425 = vmatpush1.bf16.msra.mxu0 0
    %1426 = vmatprep.subr.bf16.mxu0 0
    %1427 = vmatpush1.bf16.msra.mxu0 0
    %1428 = vmatprep.subr.bf16.mxu0 0
    %1429 = vmatpush1.bf16.msra.mxu0 0
    %1430 = vmatprep.subr.bf16.mxu0 0
    %1431 = vmatpush1.bf16.msra.mxu0 0
    %1432 = vmatprep.subr.bf16.mxu0 0
    %1433 = vmatpush1.bf16.msra.mxu0 0
    %1434 = vmatprep.mubr.bf16.mxu0 0
    %1435 = vmatmul.mubr.bf16.gmra.mrb[0].mxu0 %v366
    %v1436 = vpop.f32.mrb[0].mxu0
    %v1437 = vadd.f32 %v354, %v1436
    %v1438 = vpop.f32.mrb[0].mxu0
    %v1439 = vadd.f32 %v358, %v1438
    %v1440 = vpop.f32.mrb[0].mxu0
    %v1441 = vadd.f32 %v354, %v1440
    %v1442 = vpop.f32.mrb[0].mxu0
    %v1443 = vadd.f32 %v358, %v1442
    %1444 = vdwg.mxu0
    %1445 = vmatprep.subr.bf16.mxu0 0
    %1446 = vmatpush1.bf16.msra.mxu0 %v1356
    %1447 = vmatprep.subr.bf16.mxu0 0
    %1448 = vmatpush1.bf16.msra.mxu0 %v1359
    %1449 = vmatprep.subr.bf16.mxu0 0
    %1450 = vmatpush1.bf16.msra.mxu0 %v1362
    %1451 = vmatprep.subr.bf16.mxu0 0
    %1452 = vmatpush1.bf16.msra.mxu0 %v1365
    %1453 = vmatprep.subr.bf16.mxu0 0
    %1454 = vmatpush1.bf16.msra.mxu0 %v1368
    %1455 = vmatprep.subr.bf16.mxu0 0
    %1456 = vmatpush1.bf16.msra.mxu0 %v1371
    %1457 = vmatprep.subr.bf16.mxu0 0
    %1458 = vmatpush1.bf16.msra.mxu0 %v1374
    %1459 = vmatprep.subr.bf16.mxu0 0
    %1460 = vmatpush1.bf16.msra.mxu0 %v1377
    %1461 = vmatprep.subr.bf16.mxu0 0
    %1462 = vmatpush1.bf16.msra.mxu0 0
    %1463 = vmatprep.subr.bf16.mxu0 0
    %1464 = vmatpush1.bf16.msra.mxu0 0
    %1465 = vmatprep.subr.bf16.mxu0 0
    %1466 = vmatpush1.bf16.msra.mxu0 0
    %1467 = vmatprep.subr.bf16.mxu0 0
    %1468 = vmatpush1.bf16.msra.mxu0 0
    %1469 = vmatprep.subr.bf16.mxu0 0
    %1470 = vmatpush1.bf16.msra.mxu0 0
    %1471 = vmatprep.subr.bf16.mxu0 0
    %1472 = vmatpush1.bf16.msra.mxu0 0
    %1473 = vmatprep.subr.bf16.mxu0 0
    %1474 = vmatpush1.bf16.msra.mxu0 0
    %1475 = vmatprep.subr.bf16.mxu0 0
    %1476 = vmatpush1.bf16.msra.mxu0 0
    %1477 = vmatprep.mubr.bf16.mxu0 0
    %1478 = vmatmul.mubr.bf16.gmra.mrb[0].mxu0 %v366
    %v1479 = vpop.f32.mrb[0].mxu0
    %v1480 = vadd.f32 %v362, %v1479
    %v1481 = vpop.f32.mrb[0].mxu0
    %v1482 = vpop.f32.mrb[0].mxu0
    %v1483 = vadd.f32 %v362, %v1482
    %v1484 = vpop.f32.mrb[0].mxu0
    %1485 = vdwg.mxu0
    %v1486 = vadd.f32 %v1268, %v1437
    %v1487 = vadd.f32 %v1271, %v1441
    %v1488 = vxor.u32 %v1486, 2147483648
    %v1489 = vxor.u32 %v1487, 2147483648
    %v1490 = vmul.f32 %v1488, 1.442695
    %v1491 = vpow.pop %v1490
    %v1492 = vmul.f32 %v1489, 1.442695
    %v1493 = vpow.pop %v1492
    %v1494 = vadd.f32 %v1491, 1.0
    %v1495 = vadd.f32 %v1493, 1.0
    %v1496 = vrcp.pop %v1494
    %v1497 = vmul.f32 1.0, %v1496
    %v1498 = vrcp.pop %v1495
    %v1499 = vmul.f32 1.0, %v1498
    %v1500 = vadd.f32 %v1269, %v1439
    %v1501 = vadd.f32 %v1272, %v1443
    %v1502 = vxor.u32 %v1500, 2147483648
    %v1503 = vxor.u32 %v1501, 2147483648
    %v1504 = vmul.f32 %v1502, 1.442695
    %v1505 = vpow.pop %v1504
    %v1506 = vmul.f32 %v1503, 1.442695
    %v1507 = vpow.pop %v1506
    %v1508 = vadd.f32 %v1505, 1.0
    %v1509 = vadd.f32 %v1507, 1.0
    %v1510 = vrcp.pop %v1508
    %v1511 = vmul.f32 1.0, %v1510
    %v1512 = vrcp.pop %v1509
    %v1513 = vmul.f32 1.0, %v1512
    %v1514 = vmul.f32 %v1497, %v1480
    %v1515 = vmul.f32 %v1499, %v1483
    %v1516 = vadd.f32 %v1270, %v1514
    %v1517 = vadd.f32 %v1273, %v1515
    %v1518 = vtanh.pop %v1516
    %v1519 = vtanh.pop %v1517
    %v1520 = vsub.f32 %v170, %v1518
    %v1521 = vsub.f32 %v171, %v1519
    %v1522 = vmul.f32 %v1511, %v1520
    %v1523 = vmul.f32 %v1513, %v1521
    %v1524 = vadd.f32 %v1518, %v1522
    %v1525 = vadd.f32 %v1519, %v1523
    %1526 = vst [vmem:[#allocation16] sm:$0xff] %v1524
    %1527 = vst [vmem:[#allocation16 + $0x8] sm:$0xff] %v1525
    // Predicated region
    $region90: #{tpu_custom_call.1} parent=1 // pred_check
      _
    $region91: #{tpu_custom_call.1} parent=1 // pred_check_branch
      %1529 = sbr.rel (0) target = $region93
    $region92: #{tpu_custom_call.1} parent=1 // pred_region
      %s1531 = ssub.s32 256, 256
      %1532 = vsyncadd [#allocation4], %s1531
      %s1533 = sshll.u32 [#allocation16], 4
      %s1534 = int_to_ptr.vmem [resolvable:$true] %s1533
      %1539 = dma.vmem_to_hbm [thread:$0]  %s1534, 256, %s14, [#allocation4], 128, 128, 8
    $region93: #{tpu_custom_call.1} parent=1 // pred_fallthru
      _
    // Predicated region
    $region94: #{tpu_custom_call.1} parent=1 // pred_check
      _
    $region95: #{tpu_custom_call.1} parent=1 // pred_check_branch
      %1541 = sbr.rel (0) target = $region97
    $region96: #{tpu_custom_call.1} parent=1 // pred_region
      %1542 = dma.done [#allocation4], 256
    $region97: #{tpu_custom_call.1} parent=1 // pred_fallthru
      _
    %1543 = vsyncpa [#allocation3], 1
    %1544 = vsyncpa [#allocation6], 1
    %1545 = vsyncpa [#allocation9], 1
    %1546 = vsyncpa [#allocation12], 1
    %1547 = vsyncpa [#allocation15], 1
    %1548 = vsyncpa [#allocation4], 1

</llo_original>
